<compile_context>
chip_gen: v7x
topology: tpu7x:2x2x1
jax: 0.10.0
libtpu: 0.0.40
codegen_flags: <defaults>
</compile_context>

<pallas_src>
import functools

import jax
import jax.numpy as jnp
from jax import lax
from jax.experimental import pallas as pl
from jax.experimental.pallas import tpu as pltpu

T = 8            # SNN timesteps
BETA = 0.9       # LIF membrane decay
THRESH = 1.0     # spike threshold
LANE = 128       # TPU lane width (class-dim padding target)
BATCH_ALIGN = 16 # bf16 sublane packing (batch-dim padding target)


def _round_up(x, m):
    return (x + m - 1) // m * m


def _pick_tb(b_pad, max_tb=256):
    """Largest multiple-of-16 tile <= max_tb dividing b_pad, preferring >= 2
    grid steps so the batch axis can shard across both v7x TensorCores."""
    cands = [c for c in range(BATCH_ALIGN, min(max_tb, b_pad) + 1, BATCH_ALIGN)
             if b_pad % c == 0]
    multi = [c for c in cands if b_pad // c >= 2]
    return max(multi) if multi else max(cands)


def _resident_spec(shape):
    """Grid-invariant weight spec; single-buffer it if supported (minor VMEM win)."""
    try:
        return pl.BlockSpec(shape, lambda i: (0, 0), pipeline_mode=pl.Buffered(1))
    except Exception:  # older BlockSpec without pipeline_mode
        return pl.BlockSpec(shape, lambda i: (0, 0))


def spiking_kernel(x_ref, w_enc_ref, w_out_ref, out_ref, cur_ref, *, num_classes):
    # ---- encoder: bf16 x @ bf16 W_enc -> f32 current (same every timestep).
    #      Stashed in a small VMEM scratch to keep vreg pressure low in the unroll.
    cur_ref[...] = jnp.dot(x_ref[...], w_enc_ref[...],
                           preferred_element_type=jnp.float32)        # (tb, HID) f32
    tb, hid = cur_ref.shape
    c_pad = w_out_ref.shape[1]                                        # 128-padded

    # ---- LIF dynamics unrolled over T with a fused running max-over-time
    #      readout: one (tb, HID) @ (HID, c_pad) bf16 dot per step, w_out
    #      resident in VMEM.  No (T*tb, *) intermediates are materialized.
    mem = jnp.zeros((tb, hid), jnp.float32)
    x_max = jnp.full((tb, c_pad), -jnp.inf, jnp.float32)
    for _ in range(T):                                                # static unroll, T=8
        mem = BETA * mem + cur_ref[...]
        spk = mem > THRESH
        mem = mem - spk.astype(jnp.float32) * THRESH                  # soft reset
        logits = jnp.dot(spk.astype(w_out_ref.dtype), w_out_ref[...],
                         preferred_element_type=jnp.float32)          # (tb, c_pad)
        x_max = jnp.maximum(x_max, logits)                            # torch.max(x, 0)

    # mask zero-weight padded classes so they don't pollute max / log_softmax
    cls = lax.broadcasted_iota(jnp.int32, (tb, c_pad), 1)
    x_max = jnp.where(cls < num_classes, x_max, -jnp.inf)

    # log_softmax over the class dim (dim=1)
    m = jnp.max(x_max, axis=1, keepdims=True)
    z = x_max - m
    lse = jnp.log(jnp.sum(jnp.exp(z), axis=1, keepdims=True))
    out_ref[...] = z - lse                                            # lane-dense store


def spiking_model(x_img, w_enc, w_out, *, max_tb=256):
    """x_img: (B, C_in, H, W) NCHW.  Returns (B, NUM_CLASSES) log-probs."""
    B = x_img.shape[0]
    x = x_img.reshape(B, -1)                                          # (B, D)
    D = x.shape[1]
    HID = w_enc.shape[1]
    C = w_out.shape[1]

    B_pad = _round_up(max(B, 1), BATCH_ALIGN)                         # sublane pad only
    C_pad = _round_up(C, LANE)                                        # lane-dense classes
    tb = _pick_tb(B_pad, max_tb)

    # bf16 operands (f32 accumulation inside the kernel); zero-pad batch & classes.
    x_p = jnp.pad(x.astype(jnp.float32), ((0, B_pad - B), (0, 0))).astype(jnp.bfloat16)
    w_enc_b = w_enc.astype(jnp.bfloat16)
    w_out_b = jnp.pad(w_out.astype(jnp.float32),
                      ((0, 0), (0, C_pad - C))).astype(jnp.bfloat16)

    cost = pl.CostEstimate(
        flops=2 * B_pad * D * HID + 2 * T * B_pad * HID * C_pad,
        transcendentals=B_pad * C_pad,                                # exp in softmax
        bytes_accessed=(x_p.size + w_enc_b.size + w_out_b.size) * 2 + B_pad * C_pad * 4,
    )

    out_padded = pl.pallas_call(
        functools.partial(spiking_kernel, num_classes=C),
        out_shape=jax.ShapeDtypeStruct((B_pad, C_pad), jnp.float32),
        grid_spec=pltpu.PrefetchScalarGridSpec(
            num_scalar_prefetch=0,
            grid=(B_pad // tb,),
            in_specs=[
                pl.BlockSpec((tb, D), lambda i: (i, 0)),              # batch-tiled input
                _resident_spec((D, HID)),                             # encoder weights
                _resident_spec((HID, C_pad)),                         # padded readout weights
            ],
            out_specs=pl.BlockSpec((tb, C_pad), lambda i: (i, 0)),
            scratch_shapes=[pltpu.VMEM((tb, HID), jnp.float32)],      # encoder current
        ),
        compiler_params=pltpu.CompilerParams(
            dimension_semantics=("parallel",)),                       # batch axis -> megacore
        cost_estimate=cost,
    )(x_p, w_enc_b, w_out_b)

    return out_padded[:B, :C]


def reference(x_img, w_enc, w_out):
    """Pure-JAX reference (same bf16-rounded operands, f32 math)."""
    B = x_img.shape[0]
    x = x_img.reshape(B, -1).astype(jnp.bfloat16).astype(jnp.float32)
    we = w_enc.astype(jnp.bfloat16).astype(jnp.float32)
    wo = w_out.astype(jnp.bfloat16).astype(jnp.float32)
    cur = x @ we
    mem = jnp.zeros_like(cur)
    outs = []
    for _ in range(T):
        mem = BETA * mem + cur
        spk = (mem > THRESH).astype(jnp.float32)
        mem = mem - spk * THRESH
        outs.append(spk @ wo)
    stacked = jnp.stack(outs, axis=0)                                 # (T, B, C)
    x_max = jnp.max(stacked, axis=0)                                  # torch.max(x, 0)
    return jax.nn.log_softmax(x_max, axis=1)                          # dim=1


if __name__ == "__main__":
    key = jax.random.PRNGKey(0)
    k1, k2, k3 = jax.random.split(key, 3)

    B, C_IN, HH, WW = 8, 4, 16, 16
    D = C_IN * HH * WW      # 1024
    HID = 128
    NUM_CLASSES = 10

    x_img = jax.random.normal(k1, (B, C_IN, HH, WW), jnp.float32)
    w_enc = jax.random.normal(k2, (D, HID), jnp.float32) * (1.0 / jnp.sqrt(D))
    w_out = jax.random.normal(k3, (HID, NUM_CLASSES), jnp.float32) * (1.0 / jnp.sqrt(HID))

    out = spiking_model(x_img, w_enc, w_out)
    out = jax.block_until_ready(out)

    ref = reference(x_img, w_enc, w_out)
    assert out.shape == (B, NUM_CLASSES)
    # bf16 matmul operands -> loosened tolerance (spikes themselves stay exact 0/1)
    assert jnp.allclose(out, ref, atol=1e-2, rtol=1e-2), "mismatch vs reference"

    print("KERNEL_OK")
</pallas_src>

<mosaic_0001>
module attributes {stable_mosaic.version = 11 : i64} {
  func.func @spiking_kernel(%arg0: i32, %arg1: memref<16x1024xbf16, #tpu.memory_space<vmem>>, %arg2: memref<1024x128xbf16, #tpu.memory_space<vmem>>, %arg3: memref<128x128xbf16, #tpu.memory_space<vmem>>, %arg4: memref<16x128xf32, #tpu.memory_space<vmem>>, %arg5: memref<16x128xf32, #tpu.memory_space<vmem>>) attributes {dimension_semantics = [#tpu.dimension_semantics<parallel>], iteration_bounds = array<i64: 1>, scalar_prefetch = 0 : i64, scratch_operands = 1 : i64, tpu.core_type = #tpu.core_type<tc>, window_params = [{transform_indices = @transform_0, window_bounds = array<i64: 16, 1024>}, {pipeline_mode = #tpu.pipeline_mode<synchronous>, transform_indices = @transform_1, window_bounds = array<i64: 1024, 128>}, {pipeline_mode = #tpu.pipeline_mode<synchronous>, transform_indices = @transform_2, window_bounds = array<i64: 128, 128>}, {transform_indices = @transform_3, window_bounds = array<i64: 16, 128>}]} {
    %c0 = arith.constant 0 : index
    %c0_0 = arith.constant 0 : index
    %0 = vector.load %arg1[%c0, %c0_0] : memref<16x1024xbf16, #tpu.memory_space<vmem>>, vector<16x1024xbf16>
    %c0_1 = arith.constant 0 : index
    %c0_2 = arith.constant 0 : index
    %1 = vector.load %arg2[%c0_1, %c0_2] : memref<1024x128xbf16, #tpu.memory_space<vmem>>, vector<1024x128xbf16>
    %cst = arith.constant dense<0.000000e+00> : vector<16x128xf32>
    %2 = tpu.matmul %0, %1, %cst {dimension_numbers = #tpu.dot_dimension_numbers<[1], [0], [0], [1], [0, 0, 1, 1], [], []>} : vector<16x1024xbf16>, vector<1024x128xbf16>, vector<16x128xf32> -> vector<16x128xf32>
    %c0_3 = arith.constant 0 : index
    %c0_4 = arith.constant 0 : index
    %3 = vector.load %arg5[%c0_3, %c0_4] : memref<16x128xf32, #tpu.memory_space<vmem>>, vector<16x128xf32>
    tpu.vector_store %arg5[%c0_3, %c0_4], %2 {strides = array<i32>} : memref<16x128xf32, #tpu.memory_space<vmem>>, vector<16x128xf32>,
    %cst_5 = arith.constant 0.000000e+00 : f32
    %4 = vector.broadcast %cst_5 : f32 to vector<16x128xf32>
    %cst_6 = arith.constant 0xFF800000 : f32
    %5 = vector.broadcast %cst_6 : f32 to vector<16x128xf32>
    %cst_7 = arith.constant 0.899999976 : f32
    %6 = vector.broadcast %cst_7 : f32 to vector<16x128xf32>
    %7 = arith.mulf %6, %4 : vector<16x128xf32>
    %c0_8 = arith.constant 0 : index
    %c0_9 = arith.constant 0 : index
    %8 = vector.load %arg5[%c0_8, %c0_9] : memref<16x128xf32, #tpu.memory_space<vmem>>, vector<16x128xf32>
    %9 = arith.addf %7, %8 : vector<16x128xf32>
    %cst_10 = arith.constant 1.000000e+00 : f32
    %10 = vector.broadcast %cst_10 : f32 to vector<16x128xf32>
    %11 = arith.cmpf ogt, %9, %10 : vector<16x128xf32>
    %12 = arith.extui %11 : vector<16x128xi1> to vector<16x128xi32>
    %13 = arith.sitofp %12 : vector<16x128xi32> to vector<16x128xf32>
    %cst_11 = arith.constant 1.000000e+00 : f32
    %14 = vector.broadcast %cst_11 : f32 to vector<16x128xf32>
    %15 = arith.mulf %13, %14 : vector<16x128xf32>
    %16 = arith.subf %9, %15 : vector<16x128xf32>
    %17 = arith.extui %11 : vector<16x128xi1> to vector<16x128xi32>
    %18 = arith.sitofp %17 : vector<16x128xi32> to vector<16x128xf32>
    %19 = arith.truncf %18 : vector<16x128xf32> to vector<16x128xbf16>
    %c0_12 = arith.constant 0 : index
    %c0_13 = arith.constant 0 : index
    %20 = vector.load %arg3[%c0_12, %c0_13] : memref<128x128xbf16, #tpu.memory_space<vmem>>, vector<128x128xbf16>
    %cst_14 = arith.constant dense<0.000000e+00> : vector<16x128xf32>
    %21 = tpu.matmul %19, %20, %cst_14 {dimension_numbers = #tpu.dot_dimension_numbers<[1], [0], [0], [1], [0, 0, 1, 1], [], []>} : vector<16x128xbf16>, vector<128x128xbf16>, vector<16x128xf32> -> vector<16x128xf32>
    %22 = arith.maximumf %5, %21 : vector<16x128xf32>
    %cst_15 = arith.constant 0.899999976 : f32
    %23 = vector.broadcast %cst_15 : f32 to vector<16x128xf32>
    %24 = arith.mulf %23, %16 : vector<16x128xf32>
    %c0_16 = arith.constant 0 : index
    %c0_17 = arith.constant 0 : index
    %25 = vector.load %arg5[%c0_16, %c0_17] : memref<16x128xf32, #tpu.memory_space<vmem>>, vector<16x128xf32>
    %26 = arith.addf %24, %25 : vector<16x128xf32>
    %cst_18 = arith.constant 1.000000e+00 : f32
    %27 = vector.broadcast %cst_18 : f32 to vector<16x128xf32>
    %28 = arith.cmpf ogt, %26, %27 : vector<16x128xf32>
    %29 = arith.extui %28 : vector<16x128xi1> to vector<16x128xi32>
    %30 = arith.sitofp %29 : vector<16x128xi32> to vector<16x128xf32>
    %cst_19 = arith.constant 1.000000e+00 : f32
    %31 = vector.broadcast %cst_19 : f32 to vector<16x128xf32>
    %32 = arith.mulf %30, %31 : vector<16x128xf32>
    %33 = arith.subf %26, %32 : vector<16x128xf32>
    %34 = arith.extui %28 : vector<16x128xi1> to vector<16x128xi32>
    %35 = arith.sitofp %34 : vector<16x128xi32> to vector<16x128xf32>
    %36 = arith.truncf %35 : vector<16x128xf32> to vector<16x128xbf16>
    %c0_20 = arith.constant 0 : index
    %c0_21 = arith.constant 0 : index
    %37 = vector.load %arg3[%c0_20, %c0_21] : memref<128x128xbf16, #tpu.memory_space<vmem>>, vector<128x128xbf16>
    %cst_22 = arith.constant dense<0.000000e+00> : vector<16x128xf32>
    %38 = tpu.matmul %36, %37, %cst_22 {dimension_numbers = #tpu.dot_dimension_numbers<[1], [0], [0], [1], [0, 0, 1, 1], [], []>} : vector<16x128xbf16>, vector<128x128xbf16>, vector<16x128xf32> -> vector<16x128xf32>
    %39 = arith.maximumf %22, %38 : vector<16x128xf32>
    %cst_23 = arith.constant 0.899999976 : f32
    %40 = vector.broadcast %cst_23 : f32 to vector<16x128xf32>
    %41 = arith.mulf %40, %33 : vector<16x128xf32>
    %c0_24 = arith.constant 0 : index
    %c0_25 = arith.constant 0 : index
    %42 = vector.load %arg5[%c0_24, %c0_25] : memref<16x128xf32, #tpu.memory_space<vmem>>, vector<16x128xf32>
    %43 = arith.addf %41, %42 : vector<16x128xf32>
    %cst_26 = arith.constant 1.000000e+00 : f32
    %44 = vector.broadcast %cst_26 : f32 to vector<16x128xf32>
    %45 = arith.cmpf ogt, %43, %44 : vector<16x128xf32>
    %46 = arith.extui %45 : vector<16x128xi1> to vector<16x128xi32>
    %47 = arith.sitofp %46 : vector<16x128xi32> to vector<16x128xf32>
    %cst_27 = arith.constant 1.000000e+00 : f32
    %48 = vector.broadcast %cst_27 : f32 to vector<16x128xf32>
    %49 = arith.mulf %47, %48 : vector<16x128xf32>
    %50 = arith.subf %43, %49 : vector<16x128xf32>
    %51 = arith.extui %45 : vector<16x128xi1> to vector<16x128xi32>
    %52 = arith.sitofp %51 : vector<16x128xi32> to vector<16x128xf32>
    %53 = arith.truncf %52 : vector<16x128xf32> to vector<16x128xbf16>
    %c0_28 = arith.constant 0 : index
    %c0_29 = arith.constant 0 : index
    %54 = vector.load %arg3[%c0_28, %c0_29] : memref<128x128xbf16, #tpu.memory_space<vmem>>, vector<128x128xbf16>
    %cst_30 = arith.constant dense<0.000000e+00> : vector<16x128xf32>
    %55 = tpu.matmul %53, %54, %cst_30 {dimension_numbers = #tpu.dot_dimension_numbers<[1], [0], [0], [1], [0, 0, 1, 1], [], []>} : vector<16x128xbf16>, vector<128x128xbf16>, vector<16x128xf32> -> vector<16x128xf32>
    %56 = arith.maximumf %39, %55 : vector<16x128xf32>
    %cst_31 = arith.constant 0.899999976 : f32
    %57 = vector.broadcast %cst_31 : f32 to vector<16x128xf32>
    %58 = arith.mulf %57, %50 : vector<16x128xf32>
    %c0_32 = arith.constant 0 : index
    %c0_33 = arith.constant 0 : index
    %59 = vector.load %arg5[%c0_32, %c0_33] : memref<16x128xf32, #tpu.memory_space<vmem>>, vector<16x128xf32>
    %60 = arith.addf %58, %59 : vector<16x128xf32>
    %cst_34 = arith.constant 1.000000e+00 : f32
    %61 = vector.broadcast %cst_34 : f32 to vector<16x128xf32>
    %62 = arith.cmpf ogt, %60, %61 : vector<16x128xf32>
    %63 = arith.extui %62 : vector<16x128xi1> to vector<16x128xi32>
    %64 = arith.sitofp %63 : vector<16x128xi32> to vector<16x128xf32>
    %cst_35 = arith.constant 1.000000e+00 : f32
    %65 = vector.broadcast %cst_35 : f32 to vector<16x128xf32>
    %66 = arith.mulf %64, %65 : vector<16x128xf32>
    %67 = arith.subf %60, %66 : vector<16x128xf32>
    %68 = arith.extui %62 : vector<16x128xi1> to vector<16x128xi32>
    %69 = arith.sitofp %68 : vector<16x128xi32> to vector<16x128xf32>
    %70 = arith.truncf %69 : vector<16x128xf32> to vector<16x128xbf16>
    %c0_36 = arith.constant 0 : index
    %c0_37 = arith.constant 0 : index
    %71 = vector.load %arg3[%c0_36, %c0_37] : memref<128x128xbf16, #tpu.memory_space<vmem>>, vector<128x128xbf16>
    %cst_38 = arith.constant dense<0.000000e+00> : vector<16x128xf32>
    %72 = tpu.matmul %70, %71, %cst_38 {dimension_numbers = #tpu.dot_dimension_numbers<[1], [0], [0], [1], [0, 0, 1, 1], [], []>} : vector<16x128xbf16>, vector<128x128xbf16>, vector<16x128xf32> -> vector<16x128xf32>
    %73 = arith.maximumf %56, %72 : vector<16x128xf32>
    %cst_39 = arith.constant 0.899999976 : f32
    %74 = vector.broadcast %cst_39 : f32 to vector<16x128xf32>
    %75 = arith.mulf %74, %67 : vector<16x128xf32>
    %c0_40 = arith.constant 0 : index
    %c0_41 = arith.constant 0 : index
    %76 = vector.load %arg5[%c0_40, %c0_41] : memref<16x128xf32, #tpu.memory_space<vmem>>, vector<16x128xf32>
    %77 = arith.addf %75, %76 : vector<16x128xf32>
    %cst_42 = arith.constant 1.000000e+00 : f32
    %78 = vector.broadcast %cst_42 : f32 to vector<16x128xf32>
    %79 = arith.cmpf ogt, %77, %78 : vector<16x128xf32>
    %80 = arith.extui %79 : vector<16x128xi1> to vector<16x128xi32>
    %81 = arith.sitofp %80 : vector<16x128xi32> to vector<16x128xf32>
    %cst_43 = arith.constant 1.000000e+00 : f32
    %82 = vector.broadcast %cst_43 : f32 to vector<16x128xf32>
    %83 = arith.mulf %81, %82 : vector<16x128xf32>
    %84 = arith.subf %77, %83 : vector<16x128xf32>
    %85 = arith.extui %79 : vector<16x128xi1> to vector<16x128xi32>
    %86 = arith.sitofp %85 : vector<16x128xi32> to vector<16x128xf32>
    %87 = arith.truncf %86 : vector<16x128xf32> to vector<16x128xbf16>
    %c0_44 = arith.constant 0 : index
    %c0_45 = arith.constant 0 : index
    %88 = vector.load %arg3[%c0_44, %c0_45] : memref<128x128xbf16, #tpu.memory_space<vmem>>, vector<128x128xbf16>
    %cst_46 = arith.constant dense<0.000000e+00> : vector<16x128xf32>
    %89 = tpu.matmul %87, %88, %cst_46 {dimension_numbers = #tpu.dot_dimension_numbers<[1], [0], [0], [1], [0, 0, 1, 1], [], []>} : vector<16x128xbf16>, vector<128x128xbf16>, vector<16x128xf32> -> vector<16x128xf32>
    %90 = arith.maximumf %73, %89 : vector<16x128xf32>
    %cst_47 = arith.constant 0.899999976 : f32
    %91 = vector.broadcast %cst_47 : f32 to vector<16x128xf32>
    %92 = arith.mulf %91, %84 : vector<16x128xf32>
    %c0_48 = arith.constant 0 : index
    %c0_49 = arith.constant 0 : index
    %93 = vector.load %arg5[%c0_48, %c0_49] : memref<16x128xf32, #tpu.memory_space<vmem>>, vector<16x128xf32>
    %94 = arith.addf %92, %93 : vector<16x128xf32>
    %cst_50 = arith.constant 1.000000e+00 : f32
    %95 = vector.broadcast %cst_50 : f32 to vector<16x128xf32>
    %96 = arith.cmpf ogt, %94, %95 : vector<16x128xf32>
    %97 = arith.extui %96 : vector<16x128xi1> to vector<16x128xi32>
    %98 = arith.sitofp %97 : vector<16x128xi32> to vector<16x128xf32>
    %cst_51 = arith.constant 1.000000e+00 : f32
    %99 = vector.broadcast %cst_51 : f32 to vector<16x128xf32>
    %100 = arith.mulf %98, %99 : vector<16x128xf32>
    %101 = arith.subf %94, %100 : vector<16x128xf32>
    %102 = arith.extui %96 : vector<16x128xi1> to vector<16x128xi32>
    %103 = arith.sitofp %102 : vector<16x128xi32> to vector<16x128xf32>
    %104 = arith.truncf %103 : vector<16x128xf32> to vector<16x128xbf16>
    %c0_52 = arith.constant 0 : index
    %c0_53 = arith.constant 0 : index
    %105 = vector.load %arg3[%c0_52, %c0_53] : memref<128x128xbf16, #tpu.memory_space<vmem>>, vector<128x128xbf16>
    %cst_54 = arith.constant dense<0.000000e+00> : vector<16x128xf32>
    %106 = tpu.matmul %104, %105, %cst_54 {dimension_numbers = #tpu.dot_dimension_numbers<[1], [0], [0], [1], [0, 0, 1, 1], [], []>} : vector<16x128xbf16>, vector<128x128xbf16>, vector<16x128xf32> -> vector<16x128xf32>
    %107 = arith.maximumf %90, %106 : vector<16x128xf32>
    %cst_55 = arith.constant 0.899999976 : f32
    %108 = vector.broadcast %cst_55 : f32 to vector<16x128xf32>
    %109 = arith.mulf %108, %101 : vector<16x128xf32>
    %c0_56 = arith.constant 0 : index
    %c0_57 = arith.constant 0 : index
    %110 = vector.load %arg5[%c0_56, %c0_57] : memref<16x128xf32, #tpu.memory_space<vmem>>, vector<16x128xf32>
    %111 = arith.addf %109, %110 : vector<16x128xf32>
    %cst_58 = arith.constant 1.000000e+00 : f32
    %112 = vector.broadcast %cst_58 : f32 to vector<16x128xf32>
    %113 = arith.cmpf ogt, %111, %112 : vector<16x128xf32>
    %114 = arith.extui %113 : vector<16x128xi1> to vector<16x128xi32>
    %115 = arith.sitofp %114 : vector<16x128xi32> to vector<16x128xf32>
    %cst_59 = arith.constant 1.000000e+00 : f32
    %116 = vector.broadcast %cst_59 : f32 to vector<16x128xf32>
    %117 = arith.mulf %115, %116 : vector<16x128xf32>
    %118 = arith.subf %111, %117 : vector<16x128xf32>
    %119 = arith.extui %113 : vector<16x128xi1> to vector<16x128xi32>
    %120 = arith.sitofp %119 : vector<16x128xi32> to vector<16x128xf32>
    %121 = arith.truncf %120 : vector<16x128xf32> to vector<16x128xbf16>
    %c0_60 = arith.constant 0 : index
    %c0_61 = arith.constant 0 : index
    %122 = vector.load %arg3[%c0_60, %c0_61] : memref<128x128xbf16, #tpu.memory_space<vmem>>, vector<128x128xbf16>
    %cst_62 = arith.constant dense<0.000000e+00> : vector<16x128xf32>
    %123 = tpu.matmul %121, %122, %cst_62 {dimension_numbers = #tpu.dot_dimension_numbers<[1], [0], [0], [1], [0, 0, 1, 1], [], []>} : vector<16x128xbf16>, vector<128x128xbf16>, vector<16x128xf32> -> vector<16x128xf32>
    %124 = arith.maximumf %107, %123 : vector<16x128xf32>
    %cst_63 = arith.constant 0.899999976 : f32
    %125 = vector.broadcast %cst_63 : f32 to vector<16x128xf32>
    %126 = arith.mulf %125, %118 : vector<16x128xf32>
    %c0_64 = arith.constant 0 : index
    %c0_65 = arith.constant 0 : index
    %127 = vector.load %arg5[%c0_64, %c0_65] : memref<16x128xf32, #tpu.memory_space<vmem>>, vector<16x128xf32>
    %128 = arith.addf %126, %127 : vector<16x128xf32>
    %cst_66 = arith.constant 1.000000e+00 : f32
    %129 = vector.broadcast %cst_66 : f32 to vector<16x128xf32>
    %130 = arith.cmpf ogt, %128, %129 : vector<16x128xf32>
    %131 = arith.extui %130 : vector<16x128xi1> to vector<16x128xi32>
    %132 = arith.sitofp %131 : vector<16x128xi32> to vector<16x128xf32>
    %133 = arith.truncf %132 : vector<16x128xf32> to vector<16x128xbf16>
    %c0_67 = arith.constant 0 : index
    %c0_68 = arith.constant 0 : index
    %134 = vector.load %arg3[%c0_67, %c0_68] : memref<128x128xbf16, #tpu.memory_space<vmem>>, vector<128x128xbf16>
    %cst_69 = arith.constant dense<0.000000e+00> : vector<16x128xf32>
    %135 = tpu.matmul %133, %134, %cst_69 {dimension_numbers = #tpu.dot_dimension_numbers<[1], [0], [0], [1], [0, 0, 1, 1], [], []>} : vector<16x128xbf16>, vector<128x128xbf16>, vector<16x128xf32> -> vector<16x128xf32>
    %136 = arith.maximumf %124, %135 : vector<16x128xf32>
    %137 = tpu.iota {dimensions = array<i32: 1>} : vector<16x128xi32>
    %c10_i32 = arith.constant 10 : i32
    %138 = vector.broadcast %c10_i32 : i32 to vector<16x128xi32>
    %139 = arith.cmpi slt, %137, %138 : vector<16x128xi32>
    %cst_70 = arith.constant 0xFF800000 : f32
    %140 = vector.broadcast %cst_70 : f32 to vector<16x128xf32>
    %141 = arith.select %139, %136, %140 : vector<16x128xi1>, vector<16x128xf32>
    %cst_71 = arith.constant dense<0xFF800000> : vector<16xf32>
    %142 = vector.multi_reduction <maximumf>, %141, %cst_71 [1] : vector<16x128xf32> to vector<16xf32>
    %143 = vector.shape_cast %142 : vector<16xf32> to vector<16x1xf32>
    %144 = vector.broadcast %143 : vector<16x1xf32> to vector<16x128xf32>
    %145 = arith.subf %141, %144 : vector<16x128xf32>
    %146 = math.exp %145 : vector<16x128xf32>
    %cst_72 = arith.constant dense<0.000000e+00> : vector<16xf32>
    %147 = vector.multi_reduction <add>, %146, %cst_72 [1] : vector<16x128xf32> to vector<16xf32>
    %148 = vector.shape_cast %147 : vector<16xf32> to vector<16x1xf32>
    %149 = math.log %148 : vector<16x1xf32>
    %150 = vector.broadcast %149 : vector<16x1xf32> to vector<16x128xf32>
    %151 = arith.subf %145, %150 : vector<16x128xf32>
    %c0_73 = arith.constant 0 : index
    %c0_74 = arith.constant 0 : index
    %152 = vector.load %arg4[%c0_73, %c0_74] : memref<16x128xf32, #tpu.memory_space<vmem>>, vector<16x128xf32>
    tpu.vector_store %arg4[%c0_73, %c0_74], %151 {strides = array<i32>} : memref<16x128xf32, #tpu.memory_space<vmem>>, vector<16x128xf32>,
    return
  }
  func.func @transform_0(%arg0: i32) -> (i32, i32) {
    %c0_i32 = arith.constant 0 : i32
    %c0_i32_0 = arith.constant 0 : i32
    return %arg0, %c0_i32 : i32, i32
  }
  func.func @transform_1(%arg0: i32) -> (i32, i32) {
    %c0_i32 = arith.constant 0 : i32
    %c0_i32_0 = arith.constant 0 : i32
    %c0_i32_1 = arith.constant 0 : i32
    return %c0_i32, %c0_i32_0 : i32, i32
  }
  func.func @transform_2(%arg0: i32) -> (i32, i32) {
    %c0_i32 = arith.constant 0 : i32
    %c0_i32_0 = arith.constant 0 : i32
    %c0_i32_1 = arith.constant 0 : i32
    return %c0_i32, %c0_i32_0 : i32, i32
  }
  func.func @transform_3(%arg0: i32) -> (i32, i32) {
    %c0_i32 = arith.constant 0 : i32
    %c0_i32_0 = arith.constant 0 : i32
    return %arg0, %c0_i32 : i32, i32
  }
}

</mosaic_0001>

<llo_original>
// kernel: tpu_custom_call.1
$region0: #{tpu_custom_call.1}
  #allocation0 [shape = 'u32[]', space=smem, size = 0x4, offset = 0x4, fixed_abs, tag = 'smem constant byte address 0x4 - core index']
  #allocation1 [shape = 'u32[144,128]{1,0:T(1,128)}', space=vmem, size = 0x12000, scoped, tag = 'internal scratch']
  #allocation2 [shape = 'f32[16,128]{1,0:T(8,128)}', space=vmem, size = 0x2000, scoped, tag = 'scratch operand']
  %s0 = inlined_call_operand.hbm [shape: bf16[16,1024], index: 0, kind: input, shape index: {}]
  %s1 = inlined_call_operand.hbm [shape: bf16[1024,128], index: 1, kind: input, shape index: {}]
  %s2 = inlined_call_operand.hbm [shape: bf16[128,128], index: 2, kind: input, shape index: {}]
  %s3 = inlined_call_operand.hbm [shape: f32[16,128], index: 3, kind: output, shape index: {}]
  %s4 = sld [smem:[#allocation0]]
  $region34: #{tpu_custom_call.1} parent=0
    _
  %s6 = ssub.s32 1, %s4
  %s7 = scalar_select 0, %s6, %s4
  $region1: #{tpu_custom_call.1} parent=0
    #allocation3 [shape = 'u8[32768]{0}', space=vmem, size = 0x8000, scoped, tag = 'input window, operand 0, single buffered']
    #allocation4 [shape = 's32[1]{0}', space=sflag, size = 0x4, scoped, tag = 'scoped memory for tpu_custom_call.1']
    #allocation5 [shape = 's32[1]{0}', space=sflag, size = 0x4, scoped, tag = 'scoped memory for tpu_custom_call.1']
    #allocation6 [shape = 'u8[262144]{0}', space=vmem, size = 0x40000, scoped, tag = 'input window, operand 1, single buffered']
    #allocation7 [shape = 's32[1]{0}', space=sflag, size = 0x4, scoped, tag = 'scoped memory for tpu_custom_call.1']
    #allocation8 [shape = 'u8[32768]{0}', space=vmem, size = 0x8000, scoped, tag = 'input window, operand 2, single buffered']
    #allocation9 [shape = 'u8[8192]{0}', space=vmem, size = 0x2000, scoped, tag = 'output window, operand 0, single buffered']
    %8 = vsyncpa [#allocation4], 0
    %9 = vsyncpa [#allocation7], 0
    %10 = vsyncpa [#allocation5], 0
    // Predicated region
    $region2: #{tpu_custom_call.1} parent=1 // pred_check
      _
    $region3: #{tpu_custom_call.1} parent=1 // pred_check_branch
      %12 = sbr.rel (0) target = $region5
    $region4: #{tpu_custom_call.1} parent=1 // pred_region
      %s14 = ssub.s32 1024, 1024
      %15 = vsyncadd [#allocation4], %s14
      %s16 = sshll.u32 [#allocation3], 4
      %s17 = int_to_ptr.vmem [resolvable:$true] %s16
      %22 = dma.hbm_to_vmem [thread:$0]  %s0, 1024, %s17, [#allocation4], 512, 512, 32
    $region5: #{tpu_custom_call.1} parent=1 // pred_fallthru
      _
    // Predicated region
    $region6: #{tpu_custom_call.1} parent=1 // pred_check
      _
    $region7: #{tpu_custom_call.1} parent=1 // pred_check_branch
      %24 = sbr.rel (0) target = $region9
    $region8: #{tpu_custom_call.1} parent=1 // pred_region
      %s26 = ssub.s32 8192, 8192
      %27 = vsyncadd [#allocation7], %s26
      %s28 = sshll.u32 [#allocation6], 4
      %s29 = int_to_ptr.vmem [resolvable:$true] %s28
      %34 = dma.hbm_to_vmem [thread:$0]  %s1, 8192, %s29, [#allocation7], 64, 64, 4
    $region9: #{tpu_custom_call.1} parent=1 // pred_fallthru
      _
    // Predicated region
    $region10: #{tpu_custom_call.1} parent=1 // pred_check
      _
    $region11: #{tpu_custom_call.1} parent=1 // pred_check_branch
      %36 = sbr.rel (0) target = $region13
    $region12: #{tpu_custom_call.1} parent=1 // pred_region
      %s38 = ssub.s32 1024, 1024
      %39 = vsyncadd [#allocation7], %s38
      %s40 = sshll.u32 [#allocation8], 4
      %s41 = int_to_ptr.vmem [resolvable:$true] %s40
      %46 = dma.hbm_to_vmem [thread:$0]  %s2, 1024, %s41, [#allocation7], 64, 64, 4
    $region13: #{tpu_custom_call.1} parent=1 // pred_fallthru
      _
    // Predicated region
    $region14: #{tpu_custom_call.1} parent=1 // pred_check
      _
    $region15: #{tpu_custom_call.1} parent=1 // pred_check_branch
      %48 = sbr.rel (0) target = $region17
    $region16: #{tpu_custom_call.1} parent=1 // pred_region
      %49 = dma.done [#allocation4], 1024
    $region17: #{tpu_custom_call.1} parent=1 // pred_fallthru
      _
    // Predicated region
    $region18: #{tpu_custom_call.1} parent=1 // pred_check
      _
    $region19: #{tpu_custom_call.1} parent=1 // pred_check_branch
      %51 = sbr.rel (0) target = $region21
    $region20: #{tpu_custom_call.1} parent=1 // pred_region
      %52 = dma.done [#allocation7], 8192
    $region21: #{tpu_custom_call.1} parent=1 // pred_fallthru
      _
    // Predicated region
    $region22: #{tpu_custom_call.1} parent=1 // pred_check
      _
    $region23: #{tpu_custom_call.1} parent=1 // pred_check_branch
      %54 = sbr.rel (0) target = $region25
    $region24: #{tpu_custom_call.1} parent=1 // pred_region
      %55 = dma.done [#allocation7], 1024
    $region25: #{tpu_custom_call.1} parent=1 // pred_fallthru
      _
    %v57 = vld [vmem:[#allocation3] sm:$0xff]
    %v58 = vld [vmem:[#allocation3 + $0x8] sm:$0xff]
    %v59 = vld [vmem:[#allocation3 + $0x10] sm:$0xff]
    %v60 = vld [vmem:[#allocation3 + $0x18] sm:$0xff]
    %v61 = vld [vmem:[#allocation3 + $0x20] sm:$0xff]
    %v62 = vld [vmem:[#allocation3 + $0x28] sm:$0xff]
    %v63 = vld [vmem:[#allocation3 + $0x30] sm:$0xff]
    %v64 = vld [vmem:[#allocation3 + $0x38] sm:$0xff]
    %v65 = vld [vmem:[#allocation6] sm:$0xf]
    %v66 = vld [vmem:[#allocation6 + $0x4] sm:$0xf]
    %v67 = vld [vmem:[#allocation6 + $0x8] sm:$0xf]
    %v68 = vld [vmem:[#allocation6 + $0xc] sm:$0xf]
    %v69 = vld [vmem:[#allocation6 + $0x10] sm:$0xf]
    %v70 = vld [vmem:[#allocation6 + $0x14] sm:$0xf]
    %v71 = vld [vmem:[#allocation6 + $0x18] sm:$0xf]
    %v72 = vld [vmem:[#allocation6 + $0x1c] sm:$0xf]
    %v73 = vld [vmem:[#allocation6 + $0x20] sm:$0xf]
    %v74 = vld [vmem:[#allocation6 + $0x24] sm:$0xf]
    %v75 = vld [vmem:[#allocation6 + $0x28] sm:$0xf]
    %v76 = vld [vmem:[#allocation6 + $0x2c] sm:$0xf]
    %v77 = vld [vmem:[#allocation6 + $0x30] sm:$0xf]
    %v78 = vld [vmem:[#allocation6 + $0x34] sm:$0xf]
    %v79 = vld [vmem:[#allocation6 + $0x38] sm:$0xf]
    %v80 = vld [vmem:[#allocation6 + $0x3c] sm:$0xf]
    %v81 = vld [vmem:[#allocation6 + $0x40] sm:$0xf]
    %v82 = vld [vmem:[#allocation6 + $0x44] sm:$0xf]
    %v83 = vld [vmem:[#allocation6 + $0x48] sm:$0xf]
    %v84 = vld [vmem:[#allocation6 + $0x4c] sm:$0xf]
    %v85 = vld [vmem:[#allocation6 + $0x50] sm:$0xf]
    %v86 = vld [vmem:[#allocation6 + $0x54] sm:$0xf]
    %v87 = vld [vmem:[#allocation6 + $0x58] sm:$0xf]
    %v88 = vld [vmem:[#allocation6 + $0x5c] sm:$0xf]
    %v89 = vld [vmem:[#allocation6 + $0x60] sm:$0xf]
    %v90 = vld [vmem:[#allocation6 + $0x64] sm:$0xf]
    %v91 = vld [vmem:[#allocation6 + $0x68] sm:$0xf]
    %v92 = vld [vmem:[#allocation6 + $0x6c] sm:$0xf]
    %v93 = vld [vmem:[#allocation6 + $0x70] sm:$0xf]
    %v94 = vld [vmem:[#allocation6 + $0x74] sm:$0xf]
    %v95 = vld [vmem:[#allocation6 + $0x78] sm:$0xf]
    %v96 = vld [vmem:[#allocation6 + $0x7c] sm:$0xf]
    %v97 = vld [vmem:[#allocation6 + $0x80] sm:$0xf]
    %v98 = vld [vmem:[#allocation6 + $0x84] sm:$0xf]
    %v99 = vld [vmem:[#allocation6 + $0x88] sm:$0xf]
    %v100 = vld [vmem:[#allocation6 + $0x8c] sm:$0xf]
    %v101 = vld [vmem:[#allocation6 + $0x90] sm:$0xf]
    %v102 = vld [vmem:[#allocation6 + $0x94] sm:$0xf]
    %v103 = vld [vmem:[#allocation6 + $0x98] sm:$0xf]
    %v104 = vld [vmem:[#allocation6 + $0x9c] sm:$0xf]
    %v105 = vld [vmem:[#allocation6 + $0xa0] sm:$0xf]
    %v106 = vld [vmem:[#allocation6 + $0xa4] sm:$0xf]
    %v107 = vld [vmem:[#allocation6 + $0xa8] sm:$0xf]
    %v108 = vld [vmem:[#allocation6 + $0xac] sm:$0xf]
    %v109 = vld [vmem:[#allocation6 + $0xb0] sm:$0xf]
    %v110 = vld [vmem:[#allocation6 + $0xb4] sm:$0xf]
    %v111 = vld [vmem:[#allocation6 + $0xb8] sm:$0xf]
    %v112 = vld [vmem:[#allocation6 + $0xbc] sm:$0xf]
    %v113 = vld [vmem:[#allocation6 + $0xc0] sm:$0xf]
    %v114 = vld [vmem:[#allocation6 + $0xc4] sm:$0xf]
    %v115 = vld [vmem:[#allocation6 + $0xc8] sm:$0xf]
    %v116 = vld [vmem:[#allocation6 + $0xcc] sm:$0xf]
    %v117 = vld [vmem:[#allocation6 + $0xd0] sm:$0xf]
    %v118 = vld [vmem:[#allocation6 + $0xd4] sm:$0xf]
    %v119 = vld [vmem:[#allocation6 + $0xd8] sm:$0xf]
    %v120 = vld [vmem:[#allocation6 + $0xdc] sm:$0xf]
    %v121 = vld [vmem:[#allocation6 + $0xe0] sm:$0xf]
    %v122 = vld [vmem:[#allocation6 + $0xe4] sm:$0xf]
    %v123 = vld [vmem:[#allocation6 + $0xe8] sm:$0xf]
    %v124 = vld [vmem:[#allocation6 + $0xec] sm:$0xf]
    %v125 = vld [vmem:[#allocation6 + $0xf0] sm:$0xf]
    %v126 = vld [vmem:[#allocation6 + $0xf4] sm:$0xf]
    %v127 = vld [vmem:[#allocation6 + $0xf8] sm:$0xf]
    %v128 = vld [vmem:[#allocation6 + $0xfc] sm:$0xf]
    %v129 = vld [vmem:[#allocation6 + $0x100] sm:$0xf]
    %v130 = vld [vmem:[#allocation6 + $0x104] sm:$0xf]
    %v131 = vld [vmem:[#allocation6 + $0x108] sm:$0xf]
    %v132 = vld [vmem:[#allocation6 + $0x10c] sm:$0xf]
    %v133 = vld [vmem:[#allocation6 + $0x110] sm:$0xf]
    %v134 = vld [vmem:[#allocation6 + $0x114] sm:$0xf]
    %v135 = vld [vmem:[#allocation6 + $0x118] sm:$0xf]
    %v136 = vld [vmem:[#allocation6 + $0x11c] sm:$0xf]
    %v137 = vld [vmem:[#allocation6 + $0x120] sm:$0xf]
    %v138 = vld [vmem:[#allocation6 + $0x124] sm:$0xf]
    %v139 = vld [vmem:[#allocation6 + $0x128] sm:$0xf]
    %v140 = vld [vmem:[#allocation6 + $0x12c] sm:$0xf]
    %v141 = vld [vmem:[#allocation6 + $0x130] sm:$0xf]
    %v142 = vld [vmem:[#allocation6 + $0x134] sm:$0xf]
    %v143 = vld [vmem:[#allocation6 + $0x138] sm:$0xf]
    %v144 = vld [vmem:[#allocation6 + $0x13c] sm:$0xf]
    %v145 = vld [vmem:[#allocation6 + $0x140] sm:$0xf]
    %v146 = vld [vmem:[#allocation6 + $0x144] sm:$0xf]
    %v147 = vld [vmem:[#allocation6 + $0x148] sm:$0xf]
    %v148 = vld [vmem:[#allocation6 + $0x14c] sm:$0xf]
    %v149 = vld [vmem:[#allocation6 + $0x150] sm:$0xf]
    %v150 = vld [vmem:[#allocation6 + $0x154] sm:$0xf]
    %v151 = vld [vmem:[#allocation6 + $0x158] sm:$0xf]
    %v152 = vld [vmem:[#allocation6 + $0x15c] sm:$0xf]
    %v153 = vld [vmem:[#allocation6 + $0x160] sm:$0xf]
    %v154 = vld [vmem:[#allocation6 + $0x164] sm:$0xf]
    %v155 = vld [vmem:[#allocation6 + $0x168] sm:$0xf]
    %v156 = vld [vmem:[#allocation6 + $0x16c] sm:$0xf]
    %v157 = vld [vmem:[#allocation6 + $0x170] sm:$0xf]
    %v158 = vld [vmem:[#allocation6 + $0x174] sm:$0xf]
    %v159 = vld [vmem:[#allocation6 + $0x178] sm:$0xf]
    %v160 = vld [vmem:[#allocation6 + $0x17c] sm:$0xf]
    %v161 = vld [vmem:[#allocation6 + $0x180] sm:$0xf]
    %v162 = vld [vmem:[#allocation6 + $0x184] sm:$0xf]
    %v163 = vld [vmem:[#allocation6 + $0x188] sm:$0xf]
    %v164 = vld [vmem:[#allocation6 + $0x18c] sm:$0xf]
    %v165 = vld [vmem:[#allocation6 + $0x190] sm:$0xf]
    %v166 = vld [vmem:[#allocation6 + $0x194] sm:$0xf]
    %v167 = vld [vmem:[#allocation6 + $0x198] sm:$0xf]
    %v168 = vld [vmem:[#allocation6 + $0x19c] sm:$0xf]
    %v169 = vld [vmem:[#allocation6 + $0x1a0] sm:$0xf]
    %v170 = vld [vmem:[#allocation6 + $0x1a4] sm:$0xf]
    %v171 = vld [vmem:[#allocation6 + $0x1a8] sm:$0xf]
    %v172 = vld [vmem:[#allocation6 + $0x1ac] sm:$0xf]
    %v173 = vld [vmem:[#allocation6 + $0x1b0] sm:$0xf]
    %v174 = vld [vmem:[#allocation6 + $0x1b4] sm:$0xf]
    %v175 = vld [vmem:[#allocation6 + $0x1b8] sm:$0xf]
    %v176 = vld [vmem:[#allocation6 + $0x1bc] sm:$0xf]
    %v177 = vld [vmem:[#allocation6 + $0x1c0] sm:$0xf]
    %v178 = vld [vmem:[#allocation6 + $0x1c4] sm:$0xf]
    %v179 = vld [vmem:[#allocation6 + $0x1c8] sm:$0xf]
    %v180 = vld [vmem:[#allocation6 + $0x1cc] sm:$0xf]
    %v181 = vld [vmem:[#allocation6 + $0x1d0] sm:$0xf]
    %v182 = vld [vmem:[#allocation6 + $0x1d4] sm:$0xf]
    %v183 = vld [vmem:[#allocation6 + $0x1d8] sm:$0xf]
    %v184 = vld [vmem:[#allocation6 + $0x1dc] sm:$0xf]
    %v185 = vld [vmem:[#allocation6 + $0x1e0] sm:$0xf]
    %v186 = vld [vmem:[#allocation6 + $0x1e4] sm:$0xf]
    %v187 = vld [vmem:[#allocation6 + $0x1e8] sm:$0xf]
    %v188 = vld [vmem:[#allocation6 + $0x1ec] sm:$0xf]
    %v189 = vld [vmem:[#allocation6 + $0x1f0] sm:$0xf]
    %v190 = vld [vmem:[#allocation6 + $0x1f4] sm:$0xf]
    %v191 = vld [vmem:[#allocation6 + $0x1f8] sm:$0xf]
    %v192 = vld [vmem:[#allocation6 + $0x1fc] sm:$0xf]
    %v201 = vunpack.c.l.b16 %v57
    %v202 = vunpack.c.h.b16 %v57
    %v203 = vunpack.c.l.b16 %v58
    %v204 = vunpack.c.h.b16 %v58
    %v205 = vunpack.c.l.b16 %v59
    %v206 = vunpack.c.h.b16 %v59
    %v207 = vunpack.c.l.b16 %v60
    %v208 = vunpack.c.h.b16 %v60
    %v209 = vunpack.c.l.b16 %v61
    %v210 = vunpack.c.h.b16 %v61
    %v211 = vunpack.c.l.b16 %v62
    %v212 = vunpack.c.h.b16 %v62
    %v213 = vunpack.c.l.b16 %v63
    %v214 = vunpack.c.h.b16 %v63
    %v215 = vunpack.c.l.b16 %v64
    %v216 = vunpack.c.h.b16 %v64
    %v217 = vpack.c.b16 %v209, %v201
    %v218 = vpack.c.b16 %v210, %v202
    %v219 = vpack.c.b16 %v211, %v203
    %v220 = vpack.c.b16 %v212, %v204
    %v221 = vpack.c.b16 %v213, %v205
    %v222 = vpack.c.b16 %v214, %v206
    %v223 = vpack.c.b16 %v215, %v207
    %v224 = vpack.c.b16 %v216, %v208
    %v361 = vunpack.c.l.b16 %v65
    %v362 = vunpack.c.l.b16 %v66
    %v363 = vunpack.c.l.b16 %v67
    %v364 = vunpack.c.l.b16 %v68
    %v365 = vunpack.c.l.b16 %v69
    %v366 = vunpack.c.l.b16 %v70
    %v367 = vunpack.c.l.b16 %v71
    %v368 = vunpack.c.l.b16 %v72
    %v369 = vunpack.c.l.b16 %v73
    %v370 = vunpack.c.l.b16 %v74
    %v371 = vunpack.c.l.b16 %v75
    %v372 = vunpack.c.l.b16 %v76
    %v373 = vunpack.c.l.b16 %v77
    %v374 = vunpack.c.l.b16 %v78
    %v375 = vunpack.c.l.b16 %v79
    %v376 = vunpack.c.l.b16 %v80
    %v377 = vunpack.c.l.b16 %v81
    %v378 = vunpack.c.l.b16 %v82
    %v379 = vunpack.c.l.b16 %v83
    %v380 = vunpack.c.l.b16 %v84
    %v381 = vunpack.c.l.b16 %v85
    %v382 = vunpack.c.l.b16 %v86
    %v383 = vunpack.c.l.b16 %v87
    %v384 = vunpack.c.l.b16 %v88
    %v385 = vunpack.c.l.b16 %v89
    %v386 = vunpack.c.l.b16 %v90
    %v387 = vunpack.c.l.b16 %v91
    %v388 = vunpack.c.l.b16 %v92
    %v389 = vunpack.c.l.b16 %v93
    %v390 = vunpack.c.l.b16 %v94
    %v391 = vunpack.c.l.b16 %v95
    %v392 = vunpack.c.l.b16 %v96
    %v393 = vunpack.c.l.b16 %v97
    %v394 = vunpack.c.l.b16 %v98
    %v395 = vunpack.c.l.b16 %v99
    %v396 = vunpack.c.l.b16 %v100
    %v397 = vunpack.c.l.b16 %v101
    %v398 = vunpack.c.l.b16 %v102
    %v399 = vunpack.c.l.b16 %v103
    %v400 = vunpack.c.l.b16 %v104
    %v401 = vunpack.c.l.b16 %v105
    %v402 = vunpack.c.l.b16 %v106
    %v403 = vunpack.c.l.b16 %v107
    %v404 = vunpack.c.l.b16 %v108
    %v405 = vunpack.c.l.b16 %v109
    %v406 = vunpack.c.l.b16 %v110
    %v407 = vunpack.c.l.b16 %v111
    %v408 = vunpack.c.l.b16 %v112
    %v409 = vunpack.c.l.b16 %v113
    %v410 = vunpack.c.l.b16 %v114
    %v411 = vunpack.c.l.b16 %v115
    %v412 = vunpack.c.l.b16 %v116
    %v413 = vunpack.c.l.b16 %v117
    %v414 = vunpack.c.l.b16 %v118
    %v415 = vunpack.c.l.b16 %v119
    %v416 = vunpack.c.l.b16 %v120
    %v417 = vunpack.c.l.b16 %v121
    %v418 = vunpack.c.l.b16 %v122
    %v419 = vunpack.c.l.b16 %v123
    %v420 = vunpack.c.l.b16 %v124
    %v421 = vunpack.c.l.b16 %v125
    %v422 = vunpack.c.l.b16 %v126
    %v423 = vunpack.c.l.b16 %v127
    %v424 = vunpack.c.l.b16 %v128
    %v425 = vunpack.c.l.b16 %v129
    %v426 = vunpack.c.l.b16 %v130
    %v427 = vunpack.c.l.b16 %v131
    %v428 = vunpack.c.l.b16 %v132
    %v429 = vunpack.c.l.b16 %v133
    %v430 = vunpack.c.l.b16 %v134
    %v431 = vunpack.c.l.b16 %v135
    %v432 = vunpack.c.l.b16 %v136
    %v433 = vunpack.c.l.b16 %v137
    %v434 = vunpack.c.l.b16 %v138
    %v435 = vunpack.c.l.b16 %v139
    %v436 = vunpack.c.l.b16 %v140
    %v437 = vunpack.c.l.b16 %v141
    %v438 = vunpack.c.l.b16 %v142
    %v439 = vunpack.c.l.b16 %v143
    %v440 = vunpack.c.l.b16 %v144
    %v441 = vunpack.c.l.b16 %v145
    %v442 = vunpack.c.l.b16 %v146
    %v443 = vunpack.c.l.b16 %v147
    %v444 = vunpack.c.l.b16 %v148
    %v445 = vunpack.c.l.b16 %v149
    %v446 = vunpack.c.l.b16 %v150
    %v447 = vunpack.c.l.b16 %v151
    %v448 = vunpack.c.l.b16 %v152
    %v449 = vunpack.c.l.b16 %v153
    %v450 = vunpack.c.l.b16 %v154
    %v451 = vunpack.c.l.b16 %v155
    %v452 = vunpack.c.l.b16 %v156
    %v453 = vunpack.c.l.b16 %v157
    %v454 = vunpack.c.l.b16 %v158
    %v455 = vunpack.c.l.b16 %v159
    %v456 = vunpack.c.l.b16 %v160
    %v457 = vunpack.c.l.b16 %v161
    %v458 = vunpack.c.l.b16 %v162
    %v459 = vunpack.c.l.b16 %v163
    %v460 = vunpack.c.l.b16 %v164
    %v461 = vunpack.c.l.b16 %v165
    %v462 = vunpack.c.l.b16 %v166
    %v463 = vunpack.c.l.b16 %v167
    %v464 = vunpack.c.l.b16 %v168
    %v465 = vunpack.c.l.b16 %v169
    %v466 = vunpack.c.l.b16 %v170
    %v467 = vunpack.c.l.b16 %v171
    %v468 = vunpack.c.l.b16 %v172
    %v469 = vunpack.c.l.b16 %v173
    %v470 = vunpack.c.l.b16 %v174
    %v471 = vunpack.c.l.b16 %v175
    %v472 = vunpack.c.l.b16 %v176
    %v473 = vunpack.c.l.b16 %v177
    %v474 = vunpack.c.l.b16 %v178
    %v475 = vunpack.c.l.b16 %v179
    %v476 = vunpack.c.l.b16 %v180
    %v477 = vunpack.c.l.b16 %v181
    %v478 = vunpack.c.l.b16 %v182
    %v479 = vunpack.c.l.b16 %v183
    %v480 = vunpack.c.l.b16 %v184
    %v481 = vunpack.c.l.b16 %v185
    %v482 = vunpack.c.l.b16 %v186
    %v483 = vunpack.c.l.b16 %v187
    %v484 = vunpack.c.l.b16 %v188
    %v485 = vunpack.c.l.b16 %v189
    %v486 = vunpack.c.l.b16 %v190
    %v487 = vunpack.c.l.b16 %v191
    %v488 = vunpack.c.l.b16 %v192
    %v489 = vpack.c.b16 %v362, %v361
    %v490 = vpack.c.b16 %v364, %v363
    %v491 = vpack.c.b16 %v366, %v365
    %v492 = vpack.c.b16 %v368, %v367
    %v493 = vpack.c.b16 %v370, %v369
    %v494 = vpack.c.b16 %v372, %v371
    %v495 = vpack.c.b16 %v374, %v373
    %v496 = vpack.c.b16 %v376, %v375
    %v497 = vpack.c.b16 %v378, %v377
    %v498 = vpack.c.b16 %v380, %v379
    %v499 = vpack.c.b16 %v382, %v381
    %v500 = vpack.c.b16 %v384, %v383
    %v501 = vpack.c.b16 %v386, %v385
    %v502 = vpack.c.b16 %v388, %v387
    %v503 = vpack.c.b16 %v390, %v389
    %v504 = vpack.c.b16 %v392, %v391
    %v505 = vpack.c.b16 %v394, %v393
    %v506 = vpack.c.b16 %v396, %v395
    %v507 = vpack.c.b16 %v398, %v397
    %v508 = vpack.c.b16 %v400, %v399
    %v509 = vpack.c.b16 %v402, %v401
    %v510 = vpack.c.b16 %v404, %v403
    %v511 = vpack.c.b16 %v406, %v405
    %v512 = vpack.c.b16 %v408, %v407
    %v513 = vpack.c.b16 %v410, %v409
    %v514 = vpack.c.b16 %v412, %v411
    %v515 = vpack.c.b16 %v414, %v413
    %v516 = vpack.c.b16 %v416, %v415
    %v517 = vpack.c.b16 %v418, %v417
    %v518 = vpack.c.b16 %v420, %v419
    %v519 = vpack.c.b16 %v422, %v421
    %v520 = vpack.c.b16 %v424, %v423
    %v521 = vpack.c.b16 %v426, %v425
    %v522 = vpack.c.b16 %v428, %v427
    %v523 = vpack.c.b16 %v430, %v429
    %v524 = vpack.c.b16 %v432, %v431
    %v525 = vpack.c.b16 %v434, %v433
    %v526 = vpack.c.b16 %v436, %v435
    %v527 = vpack.c.b16 %v438, %v437
    %v528 = vpack.c.b16 %v440, %v439
    %v529 = vpack.c.b16 %v442, %v441
    %v530 = vpack.c.b16 %v444, %v443
    %v531 = vpack.c.b16 %v446, %v445
    %v532 = vpack.c.b16 %v448, %v447
    %v533 = vpack.c.b16 %v450, %v449
    %v534 = vpack.c.b16 %v452, %v451
    %v535 = vpack.c.b16 %v454, %v453
    %v536 = vpack.c.b16 %v456, %v455
    %v537 = vpack.c.b16 %v458, %v457
    %v538 = vpack.c.b16 %v460, %v459
    %v539 = vpack.c.b16 %v462, %v461
    %v540 = vpack.c.b16 %v464, %v463
    %v541 = vpack.c.b16 %v466, %v465
    %v542 = vpack.c.b16 %v468, %v467
    %v543 = vpack.c.b16 %v470, %v469
    %v544 = vpack.c.b16 %v472, %v471
    %v545 = vpack.c.b16 %v474, %v473
    %v546 = vpack.c.b16 %v476, %v475
    %v547 = vpack.c.b16 %v478, %v477
    %v548 = vpack.c.b16 %v480, %v479
    %v549 = vpack.c.b16 %v482, %v481
    %v550 = vpack.c.b16 %v484, %v483
    %v551 = vpack.c.b16 %v486, %v485
    %v552 = vpack.c.b16 %v488, %v487
    %617 = vmatprep.subr.bf16.mxu0 0
    %618 = vmatpush1.bf16.msra.mxu0 %v489
    %619 = vmatprep.subr.bf16.mxu0 0
    %620 = vmatpush1.bf16.msra.mxu0 %v490
    %621 = vmatprep.subr.bf16.mxu0 0
    %622 = vmatpush1.bf16.msra.mxu0 %v491
    %623 = vmatprep.subr.bf16.mxu0 0
    %624 = vmatpush1.bf16.msra.mxu0 %v492
    %625 = vmatprep.subr.bf16.mxu0 0
    %626 = vmatpush1.bf16.msra.mxu0 %v493
    %627 = vmatprep.subr.bf16.mxu0 0
    %628 = vmatpush1.bf16.msra.mxu0 %v494
    %629 = vmatprep.subr.bf16.mxu0 0
    %630 = vmatpush1.bf16.msra.mxu0 %v495
    %631 = vmatprep.subr.bf16.mxu0 0
    %632 = vmatpush1.bf16.msra.mxu0 %v496
    %633 = vmatprep.subr.bf16.mxu0 0
    %634 = vmatpush1.bf16.msra.mxu0 %v497
    %635 = vmatprep.subr.bf16.mxu0 0
    %636 = vmatpush1.bf16.msra.mxu0 %v498
    %637 = vmatprep.subr.bf16.mxu0 0
    %638 = vmatpush1.bf16.msra.mxu0 %v499
    %639 = vmatprep.subr.bf16.mxu0 0
    %640 = vmatpush1.bf16.msra.mxu0 %v500
    %641 = vmatprep.subr.bf16.mxu0 0
    %642 = vmatpush1.bf16.msra.mxu0 %v501
    %643 = vmatprep.subr.bf16.mxu0 0
    %644 = vmatpush1.bf16.msra.mxu0 %v502
    %645 = vmatprep.subr.bf16.mxu0 0
    %646 = vmatpush1.bf16.msra.mxu0 %v503
    %647 = vmatprep.subr.bf16.mxu0 0
    %648 = vmatpush1.bf16.msra.mxu0 %v504
    %649 = vmatprep.mubr.bf16.mxu0 %v218
    %650 = vmatmul.mubr.bf16.gmra.mrb[0].mxu0 %v217
    %v651 = vpop.f32.mrb[0].mxu0
    %v652 = vadd.f32 0.0, %v651
    %v653 = vpop.f32.mrb[0].mxu0
    %v654 = vpop.f32.mrb[0].mxu0
    %v655 = vadd.f32 0.0, %v654
    %v656 = vpop.f32.mrb[0].mxu0
    %657 = vdwg.mxu0
    %658 = vmatprep.subr.bf16.mxu0 0
    %659 = vmatpush1.bf16.msra.mxu0 %v505
    %660 = vmatprep.subr.bf16.mxu0 0
    %661 = vmatpush1.bf16.msra.mxu0 %v506
    %662 = vmatprep.subr.bf16.mxu0 0
    %663 = vmatpush1.bf16.msra.mxu0 %v507
    %664 = vmatprep.subr.bf16.mxu0 0
    %665 = vmatpush1.bf16.msra.mxu0 %v508
    %666 = vmatprep.subr.bf16.mxu0 0
    %667 = vmatpush1.bf16.msra.mxu0 %v509
    %668 = vmatprep.subr.bf16.mxu0 0
    %669 = vmatpush1.bf16.msra.mxu0 %v510
    %670 = vmatprep.subr.bf16.mxu0 0
    %671 = vmatpush1.bf16.msra.mxu0 %v511
    %672 = vmatprep.subr.bf16.mxu0 0
    %673 = vmatpush1.bf16.msra.mxu0 %v512
    %674 = vmatprep.subr.bf16.mxu0 0
    %675 = vmatpush1.bf16.msra.mxu0 %v513
    %676 = vmatprep.subr.bf16.mxu0 0
    %677 = vmatpush1.bf16.msra.mxu0 %v514
    %678 = vmatprep.subr.bf16.mxu0 0
    %679 = vmatpush1.bf16.msra.mxu0 %v515
    %680 = vmatprep.subr.bf16.mxu0 0
    %681 = vmatpush1.bf16.msra.mxu0 %v516
    %682 = vmatprep.subr.bf16.mxu0 0
    %683 = vmatpush1.bf16.msra.mxu0 %v517
    %684 = vmatprep.subr.bf16.mxu0 0
    %685 = vmatpush1.bf16.msra.mxu0 %v518
    %686 = vmatprep.subr.bf16.mxu0 0
    %687 = vmatpush1.bf16.msra.mxu0 %v519
    %688 = vmatprep.subr.bf16.mxu0 0
    %689 = vmatpush1.bf16.msra.mxu0 %v520
    %690 = vmatprep.mubr.bf16.mxu0 %v220
    %691 = vmatmul.mubr.bf16.gmra.mrb[0].mxu0 %v219
    %v692 = vpop.f32.mrb[0].mxu0
    %v693 = vadd.f32 %v652, %v692
    %v694 = vpop.f32.mrb[0].mxu0
    %v695 = vpop.f32.mrb[0].mxu0
    %v696 = vadd.f32 %v655, %v695
    %v697 = vpop.f32.mrb[0].mxu0
    %698 = vdwg.mxu0
    %699 = vmatprep.subr.bf16.mxu0 0
    %700 = vmatpush1.bf16.msra.mxu0 %v521
    %701 = vmatprep.subr.bf16.mxu0 0
    %702 = vmatpush1.bf16.msra.mxu0 %v522
    %703 = vmatprep.subr.bf16.mxu0 0
    %704 = vmatpush1.bf16.msra.mxu0 %v523
    %705 = vmatprep.subr.bf16.mxu0 0
    %706 = vmatpush1.bf16.msra.mxu0 %v524
    %707 = vmatprep.subr.bf16.mxu0 0
    %708 = vmatpush1.bf16.msra.mxu0 %v525
    %709 = vmatprep.subr.bf16.mxu0 0
    %710 = vmatpush1.bf16.msra.mxu0 %v526
    %711 = vmatprep.subr.bf16.mxu0 0
    %712 = vmatpush1.bf16.msra.mxu0 %v527
    %713 = vmatprep.subr.bf16.mxu0 0
    %714 = vmatpush1.bf16.msra.mxu0 %v528
    %715 = vmatprep.subr.bf16.mxu0 0
    %716 = vmatpush1.bf16.msra.mxu0 %v529
    %717 = vmatprep.subr.bf16.mxu0 0
    %718 = vmatpush1.bf16.msra.mxu0 %v530
    %719 = vmatprep.subr.bf16.mxu0 0
    %720 = vmatpush1.bf16.msra.mxu0 %v531
    %721 = vmatprep.subr.bf16.mxu0 0
    %722 = vmatpush1.bf16.msra.mxu0 %v532
    %723 = vmatprep.subr.bf16.mxu0 0
    %724 = vmatpush1.bf16.msra.mxu0 %v533
    %725 = vmatprep.subr.bf16.mxu0 0
    %726 = vmatpush1.bf16.msra.mxu0 %v534
    %727 = vmatprep.subr.bf16.mxu0 0
    %728 = vmatpush1.bf16.msra.mxu0 %v535
    %729 = vmatprep.subr.bf16.mxu0 0
    %730 = vmatpush1.bf16.msra.mxu0 %v536
    %731 = vmatprep.mubr.bf16.mxu0 %v222
    %732 = vmatmul.mubr.bf16.gmra.mrb[0].mxu0 %v221
    %v733 = vpop.f32.mrb[0].mxu0
    %v734 = vadd.f32 %v693, %v733
    %v735 = vpop.f32.mrb[0].mxu0
    %v736 = vpop.f32.mrb[0].mxu0
    %v737 = vadd.f32 %v696, %v736
    %v738 = vpop.f32.mrb[0].mxu0
    %739 = vdwg.mxu0
    %740 = vmatprep.subr.bf16.mxu0 0
    %741 = vmatpush1.bf16.msra.mxu0 %v537
    %742 = vmatprep.subr.bf16.mxu0 0
    %743 = vmatpush1.bf16.msra.mxu0 %v538
    %744 = vmatprep.subr.bf16.mxu0 0
    %745 = vmatpush1.bf16.msra.mxu0 %v539
    %746 = vmatprep.subr.bf16.mxu0 0
    %747 = vmatpush1.bf16.msra.mxu0 %v540
    %748 = vmatprep.subr.bf16.mxu0 0
    %749 = vmatpush1.bf16.msra.mxu0 %v541
    %750 = vmatprep.subr.bf16.mxu0 0
    %751 = vmatpush1.bf16.msra.mxu0 %v542
    %752 = vmatprep.subr.bf16.mxu0 0
    %753 = vmatpush1.bf16.msra.mxu0 %v543
    %754 = vmatprep.subr.bf16.mxu0 0
    %755 = vmatpush1.bf16.msra.mxu0 %v544
    %756 = vmatprep.subr.bf16.mxu0 0
    %757 = vmatpush1.bf16.msra.mxu0 %v545
    %758 = vmatprep.subr.bf16.mxu0 0
    %759 = vmatpush1.bf16.msra.mxu0 %v546
    %760 = vmatprep.subr.bf16.mxu0 0
    %761 = vmatpush1.bf16.msra.mxu0 %v547
    %762 = vmatprep.subr.bf16.mxu0 0
    %763 = vmatpush1.bf16.msra.mxu0 %v548
    %764 = vmatprep.subr.bf16.mxu0 0
    %765 = vmatpush1.bf16.msra.mxu0 %v549
    %766 = vmatprep.subr.bf16.mxu0 0
    %767 = vmatpush1.bf16.msra.mxu0 %v550
    %768 = vmatprep.subr.bf16.mxu0 0
    %769 = vmatpush1.bf16.msra.mxu0 %v551
    %770 = vmatprep.subr.bf16.mxu0 0
    %771 = vmatpush1.bf16.msra.mxu0 %v552
    %772 = vmatprep.mubr.bf16.mxu0 %v224
    %773 = vmatmul.mubr.bf16.gmra.mrb[0].mxu0 %v223
    %v774 = vpop.f32.mrb[0].mxu0
    %v775 = vadd.f32 %v734, %v774
    %v776 = vpop.f32.mrb[0].mxu0
    %v777 = vpop.f32.mrb[0].mxu0
    %v778 = vadd.f32 %v737, %v777
    %v779 = vpop.f32.mrb[0].mxu0
    %780 = vdwg.mxu0
    %781 = vst [vmem:[#allocation2] sm:$0xff] %v775
    %782 = vst [vmem:[#allocation2 + $0x8] sm:$0xff] %v778
    %v783 = vld [vmem:[#allocation2] sm:$0xff]
    %v784 = vld [vmem:[#allocation2 + $0x8] sm:$0xff]
    %v785 = vadd.f32 %v783, 0.0
    %v786 = vadd.f32 %v784, 0.0
    %vm787 = vcmp.gt.f32.partialorder %v785, 1.0
    %vm788 = vcmp.gt.f32.partialorder %v786, 1.0
    %v789 = vsel %vm787, 1, 0
    %v790 = vsel %vm788, 1, 0
    %v791 = vcvt.s32.f32 %v789
    %v792 = vcvt.s32.f32 %v790
    %v793 = vsub.f32 %v785, %v791
    %v794 = vsub.f32 %v786, %v792
    %v795 = vpack.c.bf16 %v792, %v791
    %v796 = vld [vmem:[#allocation8] sm:$0xf]
    %v797 = vld [vmem:[#allocation8 + $0x4] sm:$0xf]
    %v798 = vld [vmem:[#allocation8 + $0x8] sm:$0xf]
    %v799 = vld [vmem:[#allocation8 + $0xc] sm:$0xf]
    %v800 = vld [vmem:[#allocation8 + $0x10] sm:$0xf]
    %v801 = vld [vmem:[#allocation8 + $0x14] sm:$0xf]
    %v802 = vld [vmem:[#allocation8 + $0x18] sm:$0xf]
    %v803 = vld [vmem:[#allocation8 + $0x1c] sm:$0xf]
    %v804 = vld [vmem:[#allocation8 + $0x20] sm:$0xf]
    %v805 = vld [vmem:[#allocation8 + $0x24] sm:$0xf]
    %v806 = vld [vmem:[#allocation8 + $0x28] sm:$0xf]
    %v807 = vld [vmem:[#allocation8 + $0x2c] sm:$0xf]
    %v808 = vld [vmem:[#allocation8 + $0x30] sm:$0xf]
    %v809 = vld [vmem:[#allocation8 + $0x34] sm:$0xf]
    %v810 = vld [vmem:[#allocation8 + $0x38] sm:$0xf]
    %v811 = vld [vmem:[#allocation8 + $0x3c] sm:$0xf]
    %v828 = vunpack.c.l.b16 %v796
    %v829 = vunpack.c.l.b16 %v797
    %v830 = vunpack.c.l.b16 %v798
    %v831 = vunpack.c.l.b16 %v799
    %v832 = vunpack.c.l.b16 %v800
    %v833 = vunpack.c.l.b16 %v801
    %v834 = vunpack.c.l.b16 %v802
    %v835 = vunpack.c.l.b16 %v803
    %v836 = vunpack.c.l.b16 %v804
    %v837 = vunpack.c.l.b16 %v805
    %v838 = vunpack.c.l.b16 %v806
    %v839 = vunpack.c.l.b16 %v807
    %v840 = vunpack.c.l.b16 %v808
    %v841 = vunpack.c.l.b16 %v809
    %v842 = vunpack.c.l.b16 %v810
    %v843 = vunpack.c.l.b16 %v811
    %v844 = vpack.c.b16 %v829, %v828
    %v845 = vpack.c.b16 %v831, %v830
    %v846 = vpack.c.b16 %v833, %v832
    %v847 = vpack.c.b16 %v835, %v834
    %v848 = vpack.c.b16 %v837, %v836
    %v849 = vpack.c.b16 %v839, %v838
    %v850 = vpack.c.b16 %v841, %v840
    %v851 = vpack.c.b16 %v843, %v842
    %860 = vmatprep.subr.bf16.mxu0 0
    %861 = vmatpush1.bf16.msra.mxu0 %v844
    %862 = vmatprep.subr.bf16.mxu0 0
    %863 = vmatpush1.bf16.msra.mxu0 %v845
    %864 = vmatprep.subr.bf16.mxu0 0
    %865 = vmatpush1.bf16.msra.mxu0 %v846
    %866 = vmatprep.subr.bf16.mxu0 0
    %867 = vmatpush1.bf16.msra.mxu0 %v847
    %868 = vmatprep.subr.bf16.mxu0 0
    %869 = vmatpush1.bf16.msra.mxu0 %v848
    %870 = vmatprep.subr.bf16.mxu0 0
    %871 = vmatpush1.bf16.msra.mxu0 %v849
    %872 = vmatprep.subr.bf16.mxu0 0
    %873 = vmatpush1.bf16.msra.mxu0 %v850
    %874 = vmatprep.subr.bf16.mxu0 0
    %875 = vmatpush1.bf16.msra.mxu0 %v851
    %876 = vmatprep.subr.bf16.mxu0 0
    %877 = vmatpush1.bf16.msra.mxu0 0
    %878 = vmatprep.subr.bf16.mxu0 0
    %879 = vmatpush1.bf16.msra.mxu0 0
    %880 = vmatprep.subr.bf16.mxu0 0
    %881 = vmatpush1.bf16.msra.mxu0 0
    %882 = vmatprep.subr.bf16.mxu0 0
    %883 = vmatpush1.bf16.msra.mxu0 0
    %884 = vmatprep.subr.bf16.mxu0 0
    %885 = vmatpush1.bf16.msra.mxu0 0
    %886 = vmatprep.subr.bf16.mxu0 0
    %887 = vmatpush1.bf16.msra.mxu0 0
    %888 = vmatprep.subr.bf16.mxu0 0
    %889 = vmatpush1.bf16.msra.mxu0 0
    %890 = vmatprep.subr.bf16.mxu0 0
    %891 = vmatpush1.bf16.msra.mxu0 0
    %892 = vmatprep.mubr.bf16.mxu0 0
    %893 = vmatmul.mubr.bf16.gmra.mrb[0].mxu0 %v795
    %v894 = vpop.f32.mrb[0].mxu0
    %v895 = vadd.f32 0.0, %v894
    %v896 = vpop.f32.mrb[0].mxu0
    %v897 = vpop.f32.mrb[0].mxu0
    %v898 = vadd.f32 0.0, %v897
    %v899 = vpop.f32.mrb[0].mxu0
    %900 = vdwg.mxu0
    %v901 = vmul.f32 %v793, 0.9
    %v902 = vmul.f32 %v794, 0.9
    %v903 = vadd.f32 %v901, %v783
    %v904 = vadd.f32 %v902, %v784
    %vm905 = vcmp.gt.f32.partialorder %v903, 1.0
    %vm906 = vcmp.gt.f32.partialorder %v904, 1.0
    %v907 = vsel %vm905, 1, 0
    %v908 = vsel %vm906, 1, 0
    %v909 = vcvt.s32.f32 %v907
    %v910 = vcvt.s32.f32 %v908
    %v911 = vsub.f32 %v903, %v909
    %v912 = vsub.f32 %v904, %v910
    %v913 = vpack.c.bf16 %v910, %v909
    %914 = vmatprep.subr.bf16.mxu0 0
    %915 = vmatpush1.bf16.msra.mxu0 %v844
    %916 = vmatprep.subr.bf16.mxu0 0
    %917 = vmatpush1.bf16.msra.mxu0 %v845
    %918 = vmatprep.subr.bf16.mxu0 0
    %919 = vmatpush1.bf16.msra.mxu0 %v846
    %920 = vmatprep.subr.bf16.mxu0 0
    %921 = vmatpush1.bf16.msra.mxu0 %v847
    %922 = vmatprep.subr.bf16.mxu0 0
    %923 = vmatpush1.bf16.msra.mxu0 %v848
    %924 = vmatprep.subr.bf16.mxu0 0
    %925 = vmatpush1.bf16.msra.mxu0 %v849
    %926 = vmatprep.subr.bf16.mxu0 0
    %927 = vmatpush1.bf16.msra.mxu0 %v850
    %928 = vmatprep.subr.bf16.mxu0 0
    %929 = vmatpush1.bf16.msra.mxu0 %v851
    %930 = vmatprep.subr.bf16.mxu0 0
    %931 = vmatpush1.bf16.msra.mxu0 0
    %932 = vmatprep.subr.bf16.mxu0 0
    %933 = vmatpush1.bf16.msra.mxu0 0
    %934 = vmatprep.subr.bf16.mxu0 0
    %935 = vmatpush1.bf16.msra.mxu0 0
    %936 = vmatprep.subr.bf16.mxu0 0
    %937 = vmatpush1.bf16.msra.mxu0 0
    %938 = vmatprep.subr.bf16.mxu0 0
    %939 = vmatpush1.bf16.msra.mxu0 0
    %940 = vmatprep.subr.bf16.mxu0 0
    %941 = vmatpush1.bf16.msra.mxu0 0
    %942 = vmatprep.subr.bf16.mxu0 0
    %943 = vmatpush1.bf16.msra.mxu0 0
    %944 = vmatprep.subr.bf16.mxu0 0
    %945 = vmatpush1.bf16.msra.mxu0 0
    %946 = vmatprep.mubr.bf16.mxu0 0
    %947 = vmatmul.mubr.bf16.gmra.mrb[0].mxu0 %v913
    %v948 = vpop.f32.mrb[0].mxu0
    %v949 = vadd.f32 0.0, %v948
    %v950 = vpop.f32.mrb[0].mxu0
    %v951 = vpop.f32.mrb[0].mxu0
    %v952 = vadd.f32 0.0, %v951
    %v953 = vpop.f32.mrb[0].mxu0
    %954 = vdwg.mxu0
    %v955 = vmax.f32 %v895, %v949
    %v956 = vmax.f32 %v898, %v952
    %v957 = vmul.f32 %v911, 0.9
    %v958 = vmul.f32 %v912, 0.9
    %v959 = vadd.f32 %v957, %v783
    %v960 = vadd.f32 %v958, %v784
    %vm961 = vcmp.gt.f32.partialorder %v959, 1.0
    %vm962 = vcmp.gt.f32.partialorder %v960, 1.0
    %v963 = vsel %vm961, 1, 0
    %v964 = vsel %vm962, 1, 0
    %v965 = vcvt.s32.f32 %v963
    %v966 = vcvt.s32.f32 %v964
    %v967 = vsub.f32 %v959, %v965
    %v968 = vsub.f32 %v960, %v966
    %v969 = vpack.c.bf16 %v966, %v965
    %970 = vmatprep.subr.bf16.mxu0 0
    %971 = vmatpush1.bf16.msra.mxu0 %v844
    %972 = vmatprep.subr.bf16.mxu0 0
    %973 = vmatpush1.bf16.msra.mxu0 %v845
    %974 = vmatprep.subr.bf16.mxu0 0
    %975 = vmatpush1.bf16.msra.mxu0 %v846
    %976 = vmatprep.subr.bf16.mxu0 0
    %977 = vmatpush1.bf16.msra.mxu0 %v847
    %978 = vmatprep.subr.bf16.mxu0 0
    %979 = vmatpush1.bf16.msra.mxu0 %v848
    %980 = vmatprep.subr.bf16.mxu0 0
    %981 = vmatpush1.bf16.msra.mxu0 %v849
    %982 = vmatprep.subr.bf16.mxu0 0
    %983 = vmatpush1.bf16.msra.mxu0 %v850
    %984 = vmatprep.subr.bf16.mxu0 0
    %985 = vmatpush1.bf16.msra.mxu0 %v851
    %986 = vmatprep.subr.bf16.mxu0 0
    %987 = vmatpush1.bf16.msra.mxu0 0
    %988 = vmatprep.subr.bf16.mxu0 0
    %989 = vmatpush1.bf16.msra.mxu0 0
    %990 = vmatprep.subr.bf16.mxu0 0
    %991 = vmatpush1.bf16.msra.mxu0 0
    %992 = vmatprep.subr.bf16.mxu0 0
    %993 = vmatpush1.bf16.msra.mxu0 0
    %994 = vmatprep.subr.bf16.mxu0 0
    %995 = vmatpush1.bf16.msra.mxu0 0
    %996 = vmatprep.subr.bf16.mxu0 0
    %997 = vmatpush1.bf16.msra.mxu0 0
    %998 = vmatprep.subr.bf16.mxu0 0
    %999 = vmatpush1.bf16.msra.mxu0 0
    %1000 = vmatprep.subr.bf16.mxu0 0
    %1001 = vmatpush1.bf16.msra.mxu0 0
    %1002 = vmatprep.mubr.bf16.mxu0 0
    %1003 = vmatmul.mubr.bf16.gmra.mrb[0].mxu0 %v969
    %v1004 = vpop.f32.mrb[0].mxu0
    %v1005 = vadd.f32 0.0, %v1004
    %v1006 = vpop.f32.mrb[0].mxu0
    %v1007 = vpop.f32.mrb[0].mxu0
    %v1008 = vadd.f32 0.0, %v1007
    %v1009 = vpop.f32.mrb[0].mxu0
    %1010 = vdwg.mxu0
    %v1011 = vmax.f32 %v955, %v1005
    %v1012 = vmax.f32 %v956, %v1008
    %v1013 = vmul.f32 %v967, 0.9
    %v1014 = vmul.f32 %v968, 0.9
    %v1015 = vadd.f32 %v1013, %v783
    %v1016 = vadd.f32 %v1014, %v784
    %vm1017 = vcmp.gt.f32.partialorder %v1015, 1.0
    %vm1018 = vcmp.gt.f32.partialorder %v1016, 1.0
    %v1019 = vsel %vm1017, 1, 0
    %v1020 = vsel %vm1018, 1, 0
    %v1021 = vcvt.s32.f32 %v1019
    %v1022 = vcvt.s32.f32 %v1020
    %v1023 = vsub.f32 %v1015, %v1021
    %v1024 = vsub.f32 %v1016, %v1022
    %v1025 = vpack.c.bf16 %v1022, %v1021
    %1026 = vmatprep.subr.bf16.mxu0 0
    %1027 = vmatpush1.bf16.msra.mxu0 %v844
    %1028 = vmatprep.subr.bf16.mxu0 0
    %1029 = vmatpush1.bf16.msra.mxu0 %v845
    %1030 = vmatprep.subr.bf16.mxu0 0
    %1031 = vmatpush1.bf16.msra.mxu0 %v846
    %1032 = vmatprep.subr.bf16.mxu0 0
    %1033 = vmatpush1.bf16.msra.mxu0 %v847
    %1034 = vmatprep.subr.bf16.mxu0 0
    %1035 = vmatpush1.bf16.msra.mxu0 %v848
    %1036 = vmatprep.subr.bf16.mxu0 0
    %1037 = vmatpush1.bf16.msra.mxu0 %v849
    %1038 = vmatprep.subr.bf16.mxu0 0
    %1039 = vmatpush1.bf16.msra.mxu0 %v850
    %1040 = vmatprep.subr.bf16.mxu0 0
    %1041 = vmatpush1.bf16.msra.mxu0 %v851
    %1042 = vmatprep.subr.bf16.mxu0 0
    %1043 = vmatpush1.bf16.msra.mxu0 0
    %1044 = vmatprep.subr.bf16.mxu0 0
    %1045 = vmatpush1.bf16.msra.mxu0 0
    %1046 = vmatprep.subr.bf16.mxu0 0
    %1047 = vmatpush1.bf16.msra.mxu0 0
    %1048 = vmatprep.subr.bf16.mxu0 0
    %1049 = vmatpush1.bf16.msra.mxu0 0
    %1050 = vmatprep.subr.bf16.mxu0 0
    %1051 = vmatpush1.bf16.msra.mxu0 0
    %1052 = vmatprep.subr.bf16.mxu0 0
    %1053 = vmatpush1.bf16.msra.mxu0 0
    %1054 = vmatprep.subr.bf16.mxu0 0
    %1055 = vmatpush1.bf16.msra.mxu0 0
    %1056 = vmatprep.subr.bf16.mxu0 0
    %1057 = vmatpush1.bf16.msra.mxu0 0
    %1058 = vmatprep.mubr.bf16.mxu0 0
    %1059 = vmatmul.mubr.bf16.gmra.mrb[0].mxu0 %v1025
    %v1060 = vpop.f32.mrb[0].mxu0
    %v1061 = vadd.f32 0.0, %v1060
    %v1062 = vpop.f32.mrb[0].mxu0
    %v1063 = vpop.f32.mrb[0].mxu0
    %v1064 = vadd.f32 0.0, %v1063
    %v1065 = vpop.f32.mrb[0].mxu0
    %1066 = vdwg.mxu0
    %v1067 = vmax.f32 %v1011, %v1061
    %v1068 = vmax.f32 %v1012, %v1064
    %v1069 = vmul.f32 %v1023, 0.9
    %v1070 = vmul.f32 %v1024, 0.9
    %v1071 = vadd.f32 %v1069, %v783
    %v1072 = vadd.f32 %v1070, %v784
    %vm1073 = vcmp.gt.f32.partialorder %v1071, 1.0
    %vm1074 = vcmp.gt.f32.partialorder %v1072, 1.0
    %v1075 = vsel %vm1073, 1, 0
    %v1076 = vsel %vm1074, 1, 0
    %v1077 = vcvt.s32.f32 %v1075
    %v1078 = vcvt.s32.f32 %v1076
    %v1079 = vsub.f32 %v1071, %v1077
    %v1080 = vsub.f32 %v1072, %v1078
    %v1081 = vpack.c.bf16 %v1078, %v1077
    %1082 = vmatprep.subr.bf16.mxu0 0
    %1083 = vmatpush1.bf16.msra.mxu0 %v844
    %1084 = vmatprep.subr.bf16.mxu0 0
    %1085 = vmatpush1.bf16.msra.mxu0 %v845
    %1086 = vmatprep.subr.bf16.mxu0 0
    %1087 = vmatpush1.bf16.msra.mxu0 %v846
    %1088 = vmatprep.subr.bf16.mxu0 0
    %1089 = vmatpush1.bf16.msra.mxu0 %v847
    %1090 = vmatprep.subr.bf16.mxu0 0
    %1091 = vmatpush1.bf16.msra.mxu0 %v848
    %1092 = vmatprep.subr.bf16.mxu0 0
    %1093 = vmatpush1.bf16.msra.mxu0 %v849
    %1094 = vmatprep.subr.bf16.mxu0 0
    %1095 = vmatpush1.bf16.msra.mxu0 %v850
    %1096 = vmatprep.subr.bf16.mxu0 0
    %1097 = vmatpush1.bf16.msra.mxu0 %v851
    %1098 = vmatprep.subr.bf16.mxu0 0
    %1099 = vmatpush1.bf16.msra.mxu0 0
    %1100 = vmatprep.subr.bf16.mxu0 0
    %1101 = vmatpush1.bf16.msra.mxu0 0
    %1102 = vmatprep.subr.bf16.mxu0 0
    %1103 = vmatpush1.bf16.msra.mxu0 0
    %1104 = vmatprep.subr.bf16.mxu0 0
    %1105 = vmatpush1.bf16.msra.mxu0 0
    %1106 = vmatprep.subr.bf16.mxu0 0
    %1107 = vmatpush1.bf16.msra.mxu0 0
    %1108 = vmatprep.subr.bf16.mxu0 0
    %1109 = vmatpush1.bf16.msra.mxu0 0
    %1110 = vmatprep.subr.bf16.mxu0 0
    %1111 = vmatpush1.bf16.msra.mxu0 0
    %1112 = vmatprep.subr.bf16.mxu0 0
    %1113 = vmatpush1.bf16.msra.mxu0 0
    %1114 = vmatprep.mubr.bf16.mxu0 0
    %1115 = vmatmul.mubr.bf16.gmra.mrb[0].mxu0 %v1081
    %v1116 = vpop.f32.mrb[0].mxu0
    %v1117 = vadd.f32 0.0, %v1116
    %v1118 = vpop.f32.mrb[0].mxu0
    %v1119 = vpop.f32.mrb[0].mxu0
    %v1120 = vadd.f32 0.0, %v1119
    %v1121 = vpop.f32.mrb[0].mxu0
    %1122 = vdwg.mxu0
    %v1123 = vmax.f32 %v1067, %v1117
    %v1124 = vmax.f32 %v1068, %v1120
    %v1125 = vmul.f32 %v1079, 0.9
    %v1126 = vmul.f32 %v1080, 0.9
    %v1127 = vadd.f32 %v1125, %v783
    %v1128 = vadd.f32 %v1126, %v784
    %vm1129 = vcmp.gt.f32.partialorder %v1127, 1.0
    %vm1130 = vcmp.gt.f32.partialorder %v1128, 1.0
    %v1131 = vsel %vm1129, 1, 0
    %v1132 = vsel %vm1130, 1, 0
    %v1133 = vcvt.s32.f32 %v1131
    %v1134 = vcvt.s32.f32 %v1132
    %v1135 = vsub.f32 %v1127, %v1133
    %v1136 = vsub.f32 %v1128, %v1134
    %v1137 = vpack.c.bf16 %v1134, %v1133
    %1138 = vmatprep.subr.bf16.mxu0 0
    %1139 = vmatpush1.bf16.msra.mxu0 %v844
    %1140 = vmatprep.subr.bf16.mxu0 0
    %1141 = vmatpush1.bf16.msra.mxu0 %v845
    %1142 = vmatprep.subr.bf16.mxu0 0
    %1143 = vmatpush1.bf16.msra.mxu0 %v846
    %1144 = vmatprep.subr.bf16.mxu0 0
    %1145 = vmatpush1.bf16.msra.mxu0 %v847
    %1146 = vmatprep.subr.bf16.mxu0 0
    %1147 = vmatpush1.bf16.msra.mxu0 %v848
    %1148 = vmatprep.subr.bf16.mxu0 0
    %1149 = vmatpush1.bf16.msra.mxu0 %v849
    %1150 = vmatprep.subr.bf16.mxu0 0
    %1151 = vmatpush1.bf16.msra.mxu0 %v850
    %1152 = vmatprep.subr.bf16.mxu0 0
    %1153 = vmatpush1.bf16.msra.mxu0 %v851
    %1154 = vmatprep.subr.bf16.mxu0 0
    %1155 = vmatpush1.bf16.msra.mxu0 0
    %1156 = vmatprep.subr.bf16.mxu0 0
    %1157 = vmatpush1.bf16.msra.mxu0 0
    %1158 = vmatprep.subr.bf16.mxu0 0
    %1159 = vmatpush1.bf16.msra.mxu0 0
    %1160 = vmatprep.subr.bf16.mxu0 0
    %1161 = vmatpush1.bf16.msra.mxu0 0
    %1162 = vmatprep.subr.bf16.mxu0 0
    %1163 = vmatpush1.bf16.msra.mxu0 0
    %1164 = vmatprep.subr.bf16.mxu0 0
    %1165 = vmatpush1.bf16.msra.mxu0 0
    %1166 = vmatprep.subr.bf16.mxu0 0
    %1167 = vmatpush1.bf16.msra.mxu0 0
    %1168 = vmatprep.subr.bf16.mxu0 0
    %1169 = vmatpush1.bf16.msra.mxu0 0
    %1170 = vmatprep.mubr.bf16.mxu0 0
    %1171 = vmatmul.mubr.bf16.gmra.mrb[0].mxu0 %v1137
    %v1172 = vpop.f32.mrb[0].mxu0
    %v1173 = vadd.f32 0.0, %v1172
    %v1174 = vpop.f32.mrb[0].mxu0
    %v1175 = vpop.f32.mrb[0].mxu0
    %v1176 = vadd.f32 0.0, %v1175
    %v1177 = vpop.f32.mrb[0].mxu0
    %1178 = vdwg.mxu0
    %v1179 = vmax.f32 %v1123, %v1173
    %v1180 = vmax.f32 %v1124, %v1176
    %v1181 = vmul.f32 %v1135, 0.9
    %v1182 = vmul.f32 %v1136, 0.9
    %v1183 = vadd.f32 %v1181, %v783
    %v1184 = vadd.f32 %v1182, %v784
    %vm1185 = vcmp.gt.f32.partialorder %v1183, 1.0
    %vm1186 = vcmp.gt.f32.partialorder %v1184, 1.0
    %v1187 = vsel %vm1185, 1, 0
    %v1188 = vsel %vm1186, 1, 0
    %v1189 = vcvt.s32.f32 %v1187
    %v1190 = vcvt.s32.f32 %v1188
    %v1191 = vsub.f32 %v1183, %v1189
    %v1192 = vsub.f32 %v1184, %v1190
    %v1193 = vpack.c.bf16 %v1190, %v1189
    %1194 = vmatprep.subr.bf16.mxu0 0
    %1195 = vmatpush1.bf16.msra.mxu0 %v844
    %1196 = vmatprep.subr.bf16.mxu0 0
    %1197 = vmatpush1.bf16.msra.mxu0 %v845
    %1198 = vmatprep.subr.bf16.mxu0 0
    %1199 = vmatpush1.bf16.msra.mxu0 %v846
    %1200 = vmatprep.subr.bf16.mxu0 0
    %1201 = vmatpush1.bf16.msra.mxu0 %v847
    %1202 = vmatprep.subr.bf16.mxu0 0
    %1203 = vmatpush1.bf16.msra.mxu0 %v848
    %1204 = vmatprep.subr.bf16.mxu0 0
    %1205 = vmatpush1.bf16.msra.mxu0 %v849
    %1206 = vmatprep.subr.bf16.mxu0 0
    %1207 = vmatpush1.bf16.msra.mxu0 %v850
    %1208 = vmatprep.subr.bf16.mxu0 0
    %1209 = vmatpush1.bf16.msra.mxu0 %v851
    %1210 = vmatprep.subr.bf16.mxu0 0
    %1211 = vmatpush1.bf16.msra.mxu0 0
    %1212 = vmatprep.subr.bf16.mxu0 0
    %1213 = vmatpush1.bf16.msra.mxu0 0
    %1214 = vmatprep.subr.bf16.mxu0 0
    %1215 = vmatpush1.bf16.msra.mxu0 0
    %1216 = vmatprep.subr.bf16.mxu0 0
    %1217 = vmatpush1.bf16.msra.mxu0 0
    %1218 = vmatprep.subr.bf16.mxu0 0
    %1219 = vmatpush1.bf16.msra.mxu0 0
    %1220 = vmatprep.subr.bf16.mxu0 0
    %1221 = vmatpush1.bf16.msra.mxu0 0
    %1222 = vmatprep.subr.bf16.mxu0 0
    %1223 = vmatpush1.bf16.msra.mxu0 0
    %1224 = vmatprep.subr.bf16.mxu0 0
    %1225 = vmatpush1.bf16.msra.mxu0 0
    %1226 = vmatprep.mubr.bf16.mxu0 0
    %1227 = vmatmul.mubr.bf16.gmra.mrb[0].mxu0 %v1193
    %v1228 = vpop.f32.mrb[0].mxu0
    %v1229 = vadd.f32 0.0, %v1228
    %v1230 = vpop.f32.mrb[0].mxu0
    %v1231 = vpop.f32.mrb[0].mxu0
    %v1232 = vadd.f32 0.0, %v1231
    %v1233 = vpop.f32.mrb[0].mxu0
    %1234 = vdwg.mxu0
    %v1235 = vmax.f32 %v1179, %v1229
    %v1236 = vmax.f32 %v1180, %v1232
    %v1237 = vmul.f32 %v1191, 0.9
    %v1238 = vmul.f32 %v1192, 0.9
    %v1239 = vadd.f32 %v1237, %v783
    %v1240 = vadd.f32 %v1238, %v784
    %vm1241 = vcmp.gt.f32.partialorder %v1239, 1.0
    %vm1242 = vcmp.gt.f32.partialorder %v1240, 1.0
    %v1243 = vsel %vm1241, 1, 0
    %v1244 = vsel %vm1242, 1, 0
    %v1245 = vcvt.s32.f32 %v1243
    %v1246 = vcvt.s32.f32 %v1244
    %v1247 = vpack.c.bf16 %v1246, %v1245
    %1248 = vmatprep.subr.bf16.mxu0 0
    %1249 = vmatpush1.bf16.msra.mxu0 %v844
    %1250 = vmatprep.subr.bf16.mxu0 0
    %1251 = vmatpush1.bf16.msra.mxu0 %v845
    %1252 = vmatprep.subr.bf16.mxu0 0
    %1253 = vmatpush1.bf16.msra.mxu0 %v846
    %1254 = vmatprep.subr.bf16.mxu0 0
    %1255 = vmatpush1.bf16.msra.mxu0 %v847
    %1256 = vmatprep.subr.bf16.mxu0 0
    %1257 = vmatpush1.bf16.msra.mxu0 %v848
    %1258 = vmatprep.subr.bf16.mxu0 0
    %1259 = vmatpush1.bf16.msra.mxu0 %v849
    %1260 = vmatprep.subr.bf16.mxu0 0
    %1261 = vmatpush1.bf16.msra.mxu0 %v850
    %1262 = vmatprep.subr.bf16.mxu0 0
    %1263 = vmatpush1.bf16.msra.mxu0 %v851
    %1264 = vmatprep.subr.bf16.mxu0 0
    %1265 = vmatpush1.bf16.msra.mxu0 0
    %1266 = vmatprep.subr.bf16.mxu0 0
    %1267 = vmatpush1.bf16.msra.mxu0 0
    %1268 = vmatprep.subr.bf16.mxu0 0
    %1269 = vmatpush1.bf16.msra.mxu0 0
    %1270 = vmatprep.subr.bf16.mxu0 0
    %1271 = vmatpush1.bf16.msra.mxu0 0
    %1272 = vmatprep.subr.bf16.mxu0 0
    %1273 = vmatpush1.bf16.msra.mxu0 0
    %1274 = vmatprep.subr.bf16.mxu0 0
    %1275 = vmatpush1.bf16.msra.mxu0 0
    %1276 = vmatprep.subr.bf16.mxu0 0
    %1277 = vmatpush1.bf16.msra.mxu0 0
    %1278 = vmatprep.subr.bf16.mxu0 0
    %1279 = vmatpush1.bf16.msra.mxu0 0
    %1280 = vmatprep.mubr.bf16.mxu0 0
    %1281 = vmatmul.mubr.bf16.gmra.mrb[0].mxu0 %v1247
    %v1282 = vpop.f32.mrb[0].mxu0
    %v1283 = vadd.f32 0.0, %v1282
    %v1284 = vpop.f32.mrb[0].mxu0
    %v1285 = vpop.f32.mrb[0].mxu0
    %v1286 = vadd.f32 0.0, %v1285
    %v1287 = vpop.f32.mrb[0].mxu0
    %1288 = vdwg.mxu0
    %v1289 = vmax.f32 %v1235, %v1283
    %v1290 = vmax.f32 %v1236, %v1286
    %v1291 = vlaneseq
    %v1292 = vand.u32 %v1291, 127
    %vm1293 = vcmp.lt.s32.totalorder %v1292, 10
    %v1294 = vsel %vm1293, %v1289, -inf
    %v1295 = vsel %vm1293, %v1290, -inf
    %1296 = vmax.xlane.f32.xlu0 %v1294
    %v1297 = vpop.xlane.xlu0 %1296
    %1298 = vmax.xlane.f32.xlu0 %v1295
    %v1299 = vpop.xlane.xlu0 %1298
    %v1300 = vsub.f32 %v1294, %v1297
    %v1301 = vsub.f32 %v1295, %v1299
    %v1302 = vmul.f32 %v1300, 1.442695
    %v1303 = vpow.pop %v1302
    %v1304 = vmul.f32 %v1301, 1.442695
    %v1305 = vpow.pop %v1304
    %1306 = vadd.xlane.f32.xlu0 %v1303
    %v1307 = vpop.xlane.xlu0 %1306
    %1308 = vadd.xlane.f32.xlu0 %v1305
    %v1309 = vpop.xlane.xlu0 %1308
    %v1310 = vlog2.pop %v1307
    %v1311 = vmul.f32 %v1310, 0.6931472
    %v1312 = vlog2.pop %v1309
    %v1313 = vmul.f32 %v1312, 0.6931472
    %v1314 = vsub.f32 %v1300, %v1311
    %v1315 = vsub.f32 %v1301, %v1313
    %1316 = vst [vmem:[#allocation9] sm:$0xff] %v1314
    %1317 = vst [vmem:[#allocation9 + $0x8] sm:$0xff] %v1315
    // Predicated region
    $region26: #{tpu_custom_call.1} parent=1 // pred_check
      _
    $region27: #{tpu_custom_call.1} parent=1 // pred_check_branch
      %1319 = sbr.rel (0) target = $region29
    $region28: #{tpu_custom_call.1} parent=1 // pred_region
      %s1321 = ssub.s32 256, 256
      %1322 = vsyncadd [#allocation5], %s1321
      %s1323 = sshll.u32 [#allocation9], 4
      %s1324 = int_to_ptr.vmem [resolvable:$true] %s1323
      %1329 = dma.vmem_to_hbm [thread:$0]  %s1324, 256, %s3, [#allocation5], 128, 128, 8
    $region29: #{tpu_custom_call.1} parent=1 // pred_fallthru
      _
    // Predicated region
    $region30: #{tpu_custom_call.1} parent=1 // pred_check
      _
    $region31: #{tpu_custom_call.1} parent=1 // pred_check_branch
      %1331 = sbr.rel (0) target = $region33
    $region32: #{tpu_custom_call.1} parent=1 // pred_region
      %1332 = dma.done [#allocation5], 256
    $region33: #{tpu_custom_call.1} parent=1 // pred_fallthru
      _
    %1333 = vsyncpa [#allocation4], 1
    %1334 = vsyncpa [#allocation7], 1
    %1335 = vsyncpa [#allocation5], 1

</llo_original>
